<compile_context>
chip_gen: v6e
topology: v6e:2x2x1
jax: 0.10.0
libtpu: 0.0.40
codegen_flags: <defaults>
</compile_context>

<pallas_src>
import numpy as np
import jax
import jax.numpy as jnp
from jax import lax
from jax.experimental import pallas as pl
from jax.experimental.pallas import tpu as pltpu

# ----- synthetic configuration (SMALL shapes consistent with the module) -----
D = 128            # text_embed_dim (CLIP hidden size stand-in)
NUM_HEADS = 4      # args.num_heads_ca
HEAD_DIM = D // NUM_HEADS
CLS_HIDDEN = 256   # fixed 256 in the classification head
LABELS = 8         # args.label_number
VOCAB = 64
SEQ = 16           # tokens per sentence
LENGTHS = (3, 5)   # sentences per dialogue ("lengths" argument)
NSENT = sum(LENGTHS)
NDIAL = len(LENGTHS)
LMAX = max(LENGTHS)
POOLING = "mean_attention"   # args.pooling

TOK = NSENT * SEQ                       # flattened token rows (= 128)
QPAD = ((NDIAL + 7) // 8) * 8           # attention-output rows padded to 8
LMAXP = ((LMAX + 7) // 8) * 8           # per-dialogue rows padded (8)
RP = NDIAL * LMAXP                      # padded dialogue-segment rows (16)
HPAD = ((NUM_HEADS + 7) // 8) * 8       # padded head columns (8)
LANE_PAD = 128                          # lane-dense logits slab width
CDT = jnp.bfloat16                      # matmul operand dtype (valid v5e/v6e/v7x)


# ---------------------------------------------------------------------------
# Single fused kernel: backbone stub -> pooling -> attention_pool -> cls head
# (one grid step == one dialogue batch element)
# ---------------------------------------------------------------------------
def make_fused_kernel(pooling):
    scale = 1.0 / (HEAD_DIM ** 0.5)

    def kernel(ids_ref, mask_flat_ref, mask2d_ref, tok_emb_ref, pos_ref,
               sent_tok_ref, hoh_t_ref, gmat_ref, sum_mat_ref,
               w_in_ref, b_in_ref, wo_ref, bo_ref,
               w1_ref, b1_ref, w2_ref, b2_ref,
               attn_ref, logits_ref):
        f32 = jnp.float32

        # ---- synthetic CLIP text backbone stand-in: embedding + LayerNorm ----
        # TODO(synk): the pretrained CLIPTextModel transformer stack cannot be
        # reproduced without its checkpoint; a deterministic token+position
        # embedding + LayerNorm stands in for model_outputs.last_hidden_state.
        # TODO(synk): at a real ~49k CLIP vocab, replace the one-hot matmul with
        # a scalar-prefetch / async-copy row gather that keeps the table in HBM.
        ids = ids_ref[...]                                              # [TOK,1] i32
        vocab_iota = lax.broadcasted_iota(jnp.int32, (TOK, VOCAB), 1)
        onehot = (ids == vocab_iota).astype(CDT)                        # [TOK,VOCAB]
        emb = jnp.dot(onehot, tok_emb_ref[...],
                      preferred_element_type=f32)                       # [TOK, D]
        # position broadcast in-kernel (pos is [SEQ, D]; leading-dim reshape is free)
        emb = (emb.reshape(NSENT, SEQ, D) + pos_ref[...][None]).reshape(TOK, D)
        mu = jnp.mean(emb, axis=-1, keepdims=True)
        var = jnp.mean((emb - mu) ** 2, axis=-1, keepdims=True)
        hidden = (emb - mu) * lax.rsqrt(var + 1e-5)                     # [TOK, D]

        # ---- masked token pooling -> token_per_sentence [NSENT, D] -----------
        if pooling == "max_attention":
            h3 = hidden.reshape(NSENT, SEQ, D)
            m3 = mask2d_ref[...][:, :, None]
            tps = jnp.max(jnp.where(m3 > 0, h3, f32(-1e30)), axis=1)
        else:
            # mean pooling as one lane-dense MXU matmul; block-diagonal pooling
            # structure is a precomputed constant, only masked here.
            pool_mat = sent_tok_ref[...] * mask_flat_ref[...]           # [NSENT, TOK]
            num = jnp.dot(pool_mat, hidden, preferred_element_type=f32)
            den = jnp.maximum(jnp.sum(pool_mat, axis=1, keepdims=True), 1e-9)
            tps = num * pl.reciprocal(den, approx=True)                 # [NSENT, D]

        # ---- routing matmul: rows 0..RP-1  = per-dialogue query mean rows
        #                      rows RP..2RP-1 = zero-padded unflatten rows -----
        gmat = gmat_ref[...]                                            # [2RP, NSENT]
        x = jnp.dot(gmat, tps, preferred_element_type=f32)              # [2RP, D]
        seg = x[RP:, :]                                                 # [RP, D]
        row_valid = jnp.sum(gmat[RP:, :], axis=1, keepdims=True)        # [RP,1] in {0,1}

        # ---- fused in-projection: ONE MXU push for Q (query rows) + K,V ------
        proj = jnp.dot(x.astype(CDT), w_in_ref[...],
                       preferred_element_type=f32) + b_in_ref[...]      # [2RP, 3D]
        qp = proj[:RP, 0:D]            # query already broadcast to its block rows
        kp = proj[RP:, D:2 * D]
        vp = proj[RP:, 2 * D:3 * D]

        # per-head scores via head-membership reduce on the MXU
        hoh_t = hoh_t_ref[...]                                          # [HPAD, D]
        scores = lax.dot_general(qp * kp, hoh_t, (((1,), (1,)), ((), ())),
                                 preferred_element_type=f32) * scale    # [RP, HPAD]
        scores = jnp.where(row_valid > 0, scores, f32(-1e30))

        # batched segmented softmax over each dialogue's LMAXP rows (no Python
        # per-dialogue loop, no concatenate)
        s3 = scores.reshape(NDIAL, LMAXP, HPAD)
        v3 = row_valid.reshape(NDIAL, LMAXP, 1)
        m = jnp.max(s3, axis=1, keepdims=True)
        e = jnp.exp(s3 - m) * v3
        den = jnp.sum(e, axis=1, keepdims=True)
        probs = (e * pl.reciprocal(den, approx=True)).reshape(RP, HPAD)

        # expand per-head probabilities across that head's lanes, weight V,
        # then sum each dialogue's rows into a dense [QPAD, D] slab.
        weighted = jnp.dot(probs, hoh_t, preferred_element_type=f32) * vp   # [RP, D]
        ctx = jnp.dot(sum_mat_ref[...], weighted,
                      preferred_element_type=f32)                       # [QPAD, D]

        # output projection -> single dense (8,128)-aligned store
        attn_ref[...] = (jnp.dot(ctx.astype(CDT), wo_ref[...],
                                 preferred_element_type=f32) + bo_ref[...])

        # ---- classification head on the zero-padded dialogue rows ------------
        # (matches the reference, which applies the head to unflatten(tps));
        # Dropout(p) is identity in eval mode. Logits written lane-dense into
        # a [RP, 128] slab and sliced to LABELS outside the kernel.
        h1 = jnp.dot(seg.astype(CDT), w1_ref[...],
                     preferred_element_type=f32) + b1_ref[...]
        h1 = jnp.maximum(h1, 0.0)
        logits_ref[...] = (jnp.dot(h1.astype(CDT), w2_ref[...],
                                   preferred_element_type=f32) + b2_ref[...])

    return kernel


# ---------------------------------------------------------------------------
# Parameter init (same layout as the nn.Module) and one-time preprocessing
# ---------------------------------------------------------------------------
def init_params(key):
    ks = jax.random.split(key, 10)
    s = 0.02
    return {
        "tok_emb": jax.random.normal(ks[0], (VOCAB, D), jnp.float32) * s,
        "pos_emb": jax.random.normal(ks[1], (SEQ, D), jnp.float32) * s,
        # nn.MultiheadAttention parameters
        "in_proj_weight": jax.random.normal(ks[2], (3 * D, D), jnp.float32) * s,
        "in_proj_bias": jax.random.normal(ks[3], (3 * D,), jnp.float32) * s,
        "out_proj_weight": jax.random.normal(ks[4], (D, D), jnp.float32) * s,
        "out_proj_bias": jax.random.normal(ks[5], (D,), jnp.float32) * s,
        # classification head
        "head_w1": jax.random.normal(ks[6], (CLS_HIDDEN, D), jnp.float32) * s,
        "head_b1": jax.random.normal(ks[7], (CLS_HIDDEN,), jnp.float32) * s,
        "head_w2": jax.random.normal(ks[8], (LABELS, CLS_HIDDEN), jnp.float32) * s,
        "head_b2": jax.random.normal(ks[9], (LABELS,), jnp.float32) * s,
    }


def prepare_params(params, lengths):
    """Pre-bake weight layouts (split/transpose/concat/lane-pad, bf16 cast) and
    the static routing matrices ONCE, so every forward is a single pure
    pallas_call with no wrapper-side transposes or in-kernel iota chains."""
    wq, wk, wv = jnp.split(params["in_proj_weight"], 3, axis=0)

    # query-mean rows (replicated across each dialogue block) + zero-padded
    # unflatten rows, in one [2*RP, NSENT] routing matrix.
    gmat = np.zeros((2 * RP, NSENT), np.float32)
    off = 0
    for i, ln in enumerate(lengths):
        gmat[i * LMAXP:(i + 1) * LMAXP, off:off + ln] = 1.0 / float(ln)
        for l in range(ln):
            gmat[RP + i * LMAXP + l, off + l] = 1.0
        off += ln

    # per-dialogue segment sum, padded to QPAD output rows for an aligned store
    sum_mat = np.zeros((QPAD, RP), np.float32)
    for i in range(NDIAL):
        sum_mat[i, i * LMAXP:(i + 1) * LMAXP] = 1.0

    # block-diagonal sentence-pooling structure (mask applied in-kernel)
    sent_tok = np.zeros((NSENT, TOK), np.float32)
    for s_ in range(NSENT):
        sent_tok[s_, s_ * SEQ:(s_ + 1) * SEQ] = 1.0

    # head-membership one-hot [HPAD, D]
    hoh_t = np.zeros((HPAD, D), np.float32)
    for h in range(NUM_HEADS):
        hoh_t[h, h * HEAD_DIM:(h + 1) * HEAD_DIM] = 1.0

    # lane-padded final Linear
    w2p = np.zeros((CLS_HIDDEN, LANE_PAD), np.float32)
    b2p = np.zeros((1, LANE_PAD), np.float32)
    w2p[:, :LABELS] = np.asarray(params["head_w2"]).T
    b2p[0, :LABELS] = np.asarray(params["head_b2"])

    return {
        "tok_emb": params["tok_emb"].astype(CDT),                   # [VOCAB, D] bf16
        "pos": params["pos_emb"],                                   # [SEQ, D] f32
        "sent_tok": jnp.asarray(sent_tok),                          # [NSENT, TOK]
        "hoh_t": jnp.asarray(hoh_t),                                # [HPAD, D]
        "gmat": jnp.asarray(gmat),                                  # [2RP, NSENT]
        "sum_mat": jnp.asarray(sum_mat),                            # [QPAD, RP]
        "w_in": jnp.concatenate([wq.T, wk.T, wv.T], 1).astype(CDT), # [D, 3D] bf16
        "b_in": params["in_proj_bias"].reshape(1, 3 * D),           # f32
        "wo": params["out_proj_weight"].T.astype(CDT),              # [D, D] bf16
        "bo": params["out_proj_bias"].reshape(1, D),                # f32
        "w1": params["head_w1"].T.astype(CDT),                      # [D, 256] bf16
        "b1": params["head_b1"].reshape(1, CLS_HIDDEN),             # f32
        "w2p": jnp.asarray(w2p).astype(CDT),                        # [256, 128] bf16
        "b2p": jnp.asarray(b2p),                                    # [1, 128] f32
    }


# ---------------------------------------------------------------------------
# Forward: one fused pallas_call over a batch of independent dialogue groups
# ---------------------------------------------------------------------------
def text_model_forward(prep, input_ids, attention_mask, pooling=POOLING):
    B = input_ids.shape[0]
    ids_col = input_ids.reshape(B, TOK, 1).astype(jnp.int32)
    mask2d = attention_mask.astype(jnp.float32).reshape(B, NSENT, SEQ)
    mask_flat = mask2d.reshape(B, 1, TOK)

    def batched(shape):   # per-batch tile, batch dim squeezed in kernel
        return pl.BlockSpec((None,) + shape, lambda b, _s=len(shape): (b,) + (0,) * _s)

    def const(shape):     # constant block index -> stays VMEM-resident across steps
        return pl.BlockSpec(shape, lambda b, _s=len(shape): (0,) * _s)

    attn_out, logits_pad = pl.pallas_call(
        make_fused_kernel(pooling),
        grid=(B,),
        out_shape=(jax.ShapeDtypeStruct((B, QPAD, D), jnp.float32),
                   jax.ShapeDtypeStruct((B, RP, LANE_PAD), jnp.float32)),
        in_specs=[batched((TOK, 1)), batched((1, TOK)), batched((NSENT, SEQ)),
                  const((VOCAB, D)), const((SEQ, D)),
                  const((NSENT, TOK)), const((HPAD, D)),
                  const((2 * RP, NSENT)), const((QPAD, RP)),
                  const((D, 3 * D)), const((1, 3 * D)),
                  const((D, D)), const((1, D)),
                  const((D, CLS_HIDDEN)), const((1, CLS_HIDDEN)),
                  const((CLS_HIDDEN, LANE_PAD)), const((1, LANE_PAD))],
        out_specs=(batched((QPAD, D)), batched((RP, LANE_PAD))),
        compiler_params=pltpu.CompilerParams(
            dimension_semantics=("parallel",)),   # shards batch across v7x's 2 TCs
    )(ids_col, mask_flat, mask2d, prep["tok_emb"], prep["pos"],
      prep["sent_tok"], prep["hoh_t"], prep["gmat"], prep["sum_mat"],
      prep["w_in"], prep["b_in"], prep["wo"], prep["bo"],
      prep["w1"], prep["b1"], prep["w2p"], prep["b2p"])

    # padded slabs -> [B, NDIAL, LMAX, LABELS] / [B, NDIAL, D]
    logits = logits_pad.reshape(B, NDIAL, LMAXP, LANE_PAD)[:, :, :LMAX, :LABELS]
    attn_pooled = attn_out[:, :NDIAL, :]
    if pooling not in ("max_attention", "mean_attention"):
        attn_pooled = None
    return logits, attn_pooled


if __name__ == "__main__":
    key = jax.random.PRNGKey(0)
    k_ids, k_len, k_par = jax.random.split(key, 3)
    params = init_params(k_par)
    prep = prepare_params(params, LENGTHS)

    B = 4   # batch of independent dialogue groups, each with LENGTHS sentences
    input_ids = jax.random.randint(k_ids, (B, NSENT, SEQ), 0, VOCAB, dtype=jnp.int32)
    tok_lens = jax.random.randint(k_len, (B, NSENT), 4, SEQ + 1, dtype=jnp.int32)
    attention_mask = (jnp.arange(SEQ, dtype=jnp.int32)[None, None, :]
                      < tok_lens[:, :, None]).astype(jnp.int32)

    logits, attn_pooled = text_model_forward(prep, input_ids, attention_mask,
                                             pooling=POOLING)
    jax.block_until_ready(logits)
    jax.block_until_ready(attn_pooled)

    assert logits.shape == (B, NDIAL, LMAX, LABELS), logits.shape
    assert attn_pooled.shape == (B, NDIAL, D), attn_pooled.shape
    print("KERNEL_OK")
</pallas_src>

<mosaic_0001>
module attributes {stable_mosaic.version = 11 : i64} {
  func.func @kernel(%arg0: i32, %arg1: memref<1x128x1xi32, #tpu.memory_space<vmem>>, %arg2: memref<1x1x128xf32, #tpu.memory_space<vmem>>, %arg3: memref<1x8x16xf32, #tpu.memory_space<vmem>>, %arg4: memref<64x128xbf16, #tpu.memory_space<vmem>>, %arg5: memref<16x128xf32, #tpu.memory_space<vmem>>, %arg6: memref<8x128xf32, #tpu.memory_space<vmem>>, %arg7: memref<8x128xf32, #tpu.memory_space<vmem>>, %arg8: memref<32x8xf32, #tpu.memory_space<vmem>>, %arg9: memref<8x16xf32, #tpu.memory_space<vmem>>, %arg10: memref<128x384xbf16, #tpu.memory_space<vmem>>, %arg11: memref<1x384xf32, #tpu.memory_space<vmem>>, %arg12: memref<128x128xbf16, #tpu.memory_space<vmem>>, %arg13: memref<1x128xf32, #tpu.memory_space<vmem>>, %arg14: memref<128x256xbf16, #tpu.memory_space<vmem>>, %arg15: memref<1x256xf32, #tpu.memory_space<vmem>>, %arg16: memref<256x128xbf16, #tpu.memory_space<vmem>>, %arg17: memref<1x128xf32, #tpu.memory_space<vmem>>, %arg18: memref<1x8x128xf32, #tpu.memory_space<vmem>>, %arg19: memref<1x16x128xf32, #tpu.memory_space<vmem>>) attributes {dimension_semantics = [#tpu.dimension_semantics<parallel>], iteration_bounds = array<i64: 4>, scalar_prefetch = 0 : i64, scratch_operands = 0 : i64, tpu.core_type = #tpu.core_type<tc>, window_params = [{transform_indices = @transform_0, window_bounds = array<i64: 1, 128, 1>}, {transform_indices = @transform_1, window_bounds = array<i64: 1, 1, 128>}, {transform_indices = @transform_2, window_bounds = array<i64: 1, 8, 16>}, {pipeline_mode = #tpu.pipeline_mode<synchronous>, transform_indices = @transform_3, window_bounds = array<i64: 64, 128>}, {pipeline_mode = #tpu.pipeline_mode<synchronous>, transform_indices = @transform_4, window_bounds = array<i64: 16, 128>}, {pipeline_mode = #tpu.pipeline_mode<synchronous>, transform_indices = @transform_5, window_bounds = array<i64: 8, 128>}, {pipeline_mode = #tpu.pipeline_mode<synchronous>, transform_indices = @transform_6, window_bounds = array<i64: 8, 128>}, {pipeline_mode = #tpu.pipeline_mode<synchronous>, transform_indices = @transform_7, window_bounds = array<i64: 32, 8>}, {pipeline_mode = #tpu.pipeline_mode<synchronous>, transform_indices = @transform_8, window_bounds = array<i64: 8, 16>}, {pipeline_mode = #tpu.pipeline_mode<synchronous>, transform_indices = @transform_9, window_bounds = array<i64: 128, 384>}, {pipeline_mode = #tpu.pipeline_mode<synchronous>, transform_indices = @transform_10, window_bounds = array<i64: 1, 384>}, {pipeline_mode = #tpu.pipeline_mode<synchronous>, transform_indices = @transform_11, window_bounds = array<i64: 128, 128>}, {pipeline_mode = #tpu.pipeline_mode<synchronous>, transform_indices = @transform_12, window_bounds = array<i64: 1, 128>}, {pipeline_mode = #tpu.pipeline_mode<synchronous>, transform_indices = @transform_13, window_bounds = array<i64: 128, 256>}, {pipeline_mode = #tpu.pipeline_mode<synchronous>, transform_indices = @transform_14, window_bounds = array<i64: 1, 256>}, {pipeline_mode = #tpu.pipeline_mode<synchronous>, transform_indices = @transform_15, window_bounds = array<i64: 256, 128>}, {pipeline_mode = #tpu.pipeline_mode<synchronous>, transform_indices = @transform_16, window_bounds = array<i64: 1, 128>}, {transform_indices = @transform_17, window_bounds = array<i64: 1, 8, 128>}, {transform_indices = @transform_18, window_bounds = array<i64: 1, 16, 128>}]} {
    %c0 = arith.constant 0 : index
    %c0_0 = arith.constant 0 : index
    %c0_1 = arith.constant 0 : index
    %0 = vector.load %arg1[%c0, %c0_0, %c0_1] : memref<1x128x1xi32, #tpu.memory_space<vmem>>, vector<1x128x1xi32>
    %1 = vector.shape_cast %0 : vector<1x128x1xi32> to vector<128x1xi32>
    %2 = tpu.iota {dimensions = array<i32: 1>} : vector<128x64xi32>
    %3 = vector.broadcast %1 : vector<128x1xi32> to vector<128x64xi32>
    %4 = arith.cmpi eq, %3, %2 : vector<128x64xi32>
    %5 = arith.extui %4 : vector<128x64xi1> to vector<128x64xi32>
    %6 = arith.sitofp %5 : vector<128x64xi32> to vector<128x64xf32>
    %7 = arith.truncf %6 : vector<128x64xf32> to vector<128x64xbf16>
    %c0_2 = arith.constant 0 : index
    %c0_3 = arith.constant 0 : index
    %8 = vector.load %arg4[%c0_2, %c0_3] : memref<64x128xbf16, #tpu.memory_space<vmem>>, vector<64x128xbf16>
    %cst = arith.constant dense<0.000000e+00> : vector<128x128xf32>
    %9 = tpu.matmul %7, %8, %cst {dimension_numbers = #tpu.dot_dimension_numbers<[1], [0], [0], [1], [0, 0, 1, 1], [], []>} : vector<128x64xbf16>, vector<64x128xbf16>, vector<128x128xf32> -> vector<128x128xf32>
    %10 = vector.shape_cast %9 : vector<128x128xf32> to vector<8x16x128xf32>
    %c0_4 = arith.constant 0 : index
    %c0_5 = arith.constant 0 : index
    %11 = vector.load %arg5[%c0_4, %c0_5] : memref<16x128xf32, #tpu.memory_space<vmem>>, vector<16x128xf32>
    %12 = vector.shape_cast %11 : vector<16x128xf32> to vector<1x16x128xf32>
    %13 = vector.broadcast %12 : vector<1x16x128xf32> to vector<8x16x128xf32>
    %14 = arith.addf %10, %13 : vector<8x16x128xf32>
    %15 = vector.shape_cast %14 : vector<8x16x128xf32> to vector<128x128xf32>
    %cst_6 = arith.constant dense<0.000000e+00> : vector<128xf32>
    %16 = vector.multi_reduction <add>, %15, %cst_6 [1] : vector<128x128xf32> to vector<128xf32>
    %17 = vector.shape_cast %16 : vector<128xf32> to vector<128x1xf32>
    %cst_7 = arith.constant 1.280000e+02 : f32
    %18 = vector.broadcast %cst_7 : f32 to vector<128x1xf32>
    %19 = arith.divf %17, %18 : vector<128x1xf32>
    %20 = vector.broadcast %19 : vector<128x1xf32> to vector<128x128xf32>
    %21 = arith.subf %15, %20 : vector<128x128xf32>
    %22 = arith.mulf %21, %21 : vector<128x128xf32>
    %cst_8 = arith.constant dense<0.000000e+00> : vector<128xf32>
    %23 = vector.multi_reduction <add>, %22, %cst_8 [1] : vector<128x128xf32> to vector<128xf32>
    %24 = vector.shape_cast %23 : vector<128xf32> to vector<128x1xf32>
    %cst_9 = arith.constant 1.280000e+02 : f32
    %25 = vector.broadcast %cst_9 : f32 to vector<128x1xf32>
    %26 = arith.divf %24, %25 : vector<128x1xf32>
    %27 = vector.broadcast %19 : vector<128x1xf32> to vector<128x128xf32>
    %28 = arith.subf %15, %27 : vector<128x128xf32>
    %cst_10 = arith.constant 9.99999974E-6 : f32
    %29 = vector.broadcast %cst_10 : f32 to vector<128x1xf32>
    %30 = arith.addf %26, %29 : vector<128x1xf32>
    %31 = math.rsqrt %30 : vector<128x1xf32>
    %32 = vector.broadcast %31 : vector<128x1xf32> to vector<128x128xf32>
    %33 = arith.mulf %28, %32 : vector<128x128xf32>
    %c0_11 = arith.constant 0 : index
    %c0_12 = arith.constant 0 : index
    %34 = vector.load %arg6[%c0_11, %c0_12] : memref<8x128xf32, #tpu.memory_space<vmem>>, vector<8x128xf32>
    %c0_13 = arith.constant 0 : index
    %c0_14 = arith.constant 0 : index
    %c0_15 = arith.constant 0 : index
    %35 = vector.load %arg2[%c0_13, %c0_14, %c0_15] : memref<1x1x128xf32, #tpu.memory_space<vmem>>, vector<1x1x128xf32>
    %36 = vector.shape_cast %35 : vector<1x1x128xf32> to vector<1x128xf32>
    %37 = vector.broadcast %36 : vector<1x128xf32> to vector<8x128xf32>
    %38 = arith.mulf %34, %37 : vector<8x128xf32>
    %cst_16 = arith.constant dense<0.000000e+00> : vector<8x128xf32>
    %39 = tpu.matmul %38, %33, %cst_16 {dimension_numbers = #tpu.dot_dimension_numbers<[1], [0], [0], [1], [0, 0, 1, 1], [], []>} : vector<8x128xf32>, vector<128x128xf32>, vector<8x128xf32> -> vector<8x128xf32>
    %cst_17 = arith.constant dense<0.000000e+00> : vector<8xf32>
    %40 = vector.multi_reduction <add>, %38, %cst_17 [1] : vector<8x128xf32> to vector<8xf32>
    %41 = vector.shape_cast %40 : vector<8xf32> to vector<8x1xf32>
    %cst_18 = arith.constant 9.99999971E-10 : f32
    %42 = vector.broadcast %cst_18 : f32 to vector<8x1xf32>
    %43 = arith.maximumf %41, %42 : vector<8x1xf32>
    %44 = tpu.reciprocal %43 {approx = true} : vector<8x1xf32> -> vector<8x1xf32>
    %45 = vector.broadcast %44 : vector<8x1xf32> to vector<8x128xf32>
    %46 = arith.mulf %39, %45 : vector<8x128xf32>
    %c0_19 = arith.constant 0 : index
    %c0_20 = arith.constant 0 : index
    %47 = vector.load %arg8[%c0_19, %c0_20] : memref<32x8xf32, #tpu.memory_space<vmem>>, vector<32x8xf32>
    %cst_21 = arith.constant dense<0.000000e+00> : vector<32x128xf32>
    %48 = tpu.matmul %47, %46, %cst_21 {dimension_numbers = #tpu.dot_dimension_numbers<[1], [0], [0], [1], [0, 0, 1, 1], [], []>} : vector<32x8xf32>, vector<8x128xf32>, vector<32x128xf32> -> vector<32x128xf32>
    %49 = vector.extract_strided_slice %48 {offsets = [16, 0], sizes = [16, 128], strides = [1, 1]} : vector<32x128xf32> to vector<16x128xf32>
    %50 = vector.extract_strided_slice %47 {offsets = [16, 0], sizes = [16, 8], strides = [1, 1]} : vector<32x8xf32> to vector<16x8xf32>
    %cst_22 = arith.constant dense<0.000000e+00> : vector<16xf32>
    %51 = vector.multi_reduction <add>, %50, %cst_22 [1] : vector<16x8xf32> to vector<16xf32>
    %52 = vector.shape_cast %51 : vector<16xf32> to vector<16x1xf32>
    %53 = arith.truncf %48 : vector<32x128xf32> to vector<32x128xbf16>
    %c0_23 = arith.constant 0 : index
    %c0_24 = arith.constant 0 : index
    %54 = vector.load %arg10[%c0_23, %c0_24] : memref<128x384xbf16, #tpu.memory_space<vmem>>, vector<128x384xbf16>
    %cst_25 = arith.constant dense<0.000000e+00> : vector<32x384xf32>
    %55 = tpu.matmul %53, %54, %cst_25 {dimension_numbers = #tpu.dot_dimension_numbers<[1], [0], [0], [1], [0, 0, 1, 1], [], []>} : vector<32x128xbf16>, vector<128x384xbf16>, vector<32x384xf32> -> vector<32x384xf32>
    %c0_26 = arith.constant 0 : index
    %c0_27 = arith.constant 0 : index
    %56 = vector.load %arg11[%c0_26, %c0_27] : memref<1x384xf32, #tpu.memory_space<vmem>>, vector<1x384xf32>
    %57 = vector.broadcast %56 : vector<1x384xf32> to vector<32x384xf32>
    %58 = arith.addf %55, %57 : vector<32x384xf32>
    %59 = vector.extract_strided_slice %58 {offsets = [0, 0], sizes = [16, 128], strides = [1, 1]} : vector<32x384xf32> to vector<16x128xf32>
    %60 = vector.extract_strided_slice %58 {offsets = [16, 128], sizes = [16, 128], strides = [1, 1]} : vector<32x384xf32> to vector<16x128xf32>
    %61 = vector.extract_strided_slice %58 {offsets = [16, 256], sizes = [16, 128], strides = [1, 1]} : vector<32x384xf32> to vector<16x128xf32>
    %c0_28 = arith.constant 0 : index
    %c0_29 = arith.constant 0 : index
    %62 = vector.load %arg7[%c0_28, %c0_29] : memref<8x128xf32, #tpu.memory_space<vmem>>, vector<8x128xf32>
    %63 = arith.mulf %59, %60 : vector<16x128xf32>
    %cst_30 = arith.constant dense<0.000000e+00> : vector<16x8xf32>
    %64 = tpu.matmul %63, %62, %cst_30 {dimension_numbers = #tpu.dot_dimension_numbers<[1], [1], [0], [0], [0, 0, 1, 0], [], []>} : vector<16x128xf32>, vector<8x128xf32>, vector<16x8xf32> -> vector<16x8xf32>
    %cst_31 = arith.constant 0.176776692 : f32
    %65 = vector.broadcast %cst_31 : f32 to vector<16x8xf32>
    %66 = arith.mulf %64, %65 : vector<16x8xf32>
    %cst_32 = arith.constant 0.000000e+00 : f32
    %67 = vector.broadcast %cst_32 : f32 to vector<16x1xf32>
    %68 = arith.cmpf ogt, %52, %67 : vector<16x1xf32>
    %cst_33 = arith.constant -1.000000e+30 : f32
    %69 = vector.shape_cast %68 : vector<16x1xi1> to vector<16x1xi1>
    %70 = vector.broadcast %69 : vector<16x1xi1> to vector<16x8xi1>
    %71 = vector.broadcast %cst_33 : f32 to vector<16x8xf32>
    %72 = arith.select %70, %66, %71 : vector<16x8xi1>, vector<16x8xf32>
    %73 = vector.shape_cast %72 : vector<16x8xf32> to vector<2x8x8xf32>
    %74 = vector.shape_cast %52 : vector<16x1xf32> to vector<2x8x1xf32>
    %cst_34 = arith.constant dense<0xFF800000> : vector<2x8xf32>
    %75 = vector.multi_reduction <maximumf>, %73, %cst_34 [1] : vector<2x8x8xf32> to vector<2x8xf32>
    %76 = vector.shape_cast %75 : vector<2x8xf32> to vector<2x1x8xf32>
    %77 = vector.broadcast %76 : vector<2x1x8xf32> to vector<2x8x8xf32>
    %78 = arith.subf %73, %77 : vector<2x8x8xf32>
    %79 = math.exp %78 : vector<2x8x8xf32>
    %80 = vector.broadcast %74 : vector<2x8x1xf32> to vector<2x8x8xf32>
    %81 = arith.mulf %79, %80 : vector<2x8x8xf32>
    %cst_35 = arith.constant dense<0.000000e+00> : vector<2x8xf32>
    %82 = vector.multi_reduction <add>, %81, %cst_35 [1] : vector<2x8x8xf32> to vector<2x8xf32>
    %83 = vector.shape_cast %82 : vector<2x8xf32> to vector<2x1x8xf32>
    %84 = tpu.reciprocal %83 {approx = true} : vector<2x1x8xf32> -> vector<2x1x8xf32>
    %85 = vector.broadcast %84 : vector<2x1x8xf32> to vector<2x8x8xf32>
    %86 = arith.mulf %81, %85 : vector<2x8x8xf32>
    %87 = vector.shape_cast %86 : vector<2x8x8xf32> to vector<16x8xf32>
    %cst_36 = arith.constant dense<0.000000e+00> : vector<16x128xf32>
    %88 = tpu.matmul %87, %62, %cst_36 {dimension_numbers = #tpu.dot_dimension_numbers<[1], [0], [0], [1], [0, 0, 1, 1], [], []>} : vector<16x8xf32>, vector<8x128xf32>, vector<16x128xf32> -> vector<16x128xf32>
    %89 = arith.mulf %88, %61 : vector<16x128xf32>
    %c0_37 = arith.constant 0 : index
    %c0_38 = arith.constant 0 : index
    %90 = vector.load %arg9[%c0_37, %c0_38] : memref<8x16xf32, #tpu.memory_space<vmem>>, vector<8x16xf32>
    %cst_39 = arith.constant dense<0.000000e+00> : vector<8x128xf32>
    %91 = tpu.matmul %90, %89, %cst_39 {dimension_numbers = #tpu.dot_dimension_numbers<[1], [0], [0], [1], [0, 0, 1, 1], [], []>} : vector<8x16xf32>, vector<16x128xf32>, vector<8x128xf32> -> vector<8x128xf32>
    %92 = arith.truncf %91 : vector<8x128xf32> to vector<8x128xbf16>
    %c0_40 = arith.constant 0 : index
    %c0_41 = arith.constant 0 : index
    %93 = vector.load %arg12[%c0_40, %c0_41] : memref<128x128xbf16, #tpu.memory_space<vmem>>, vector<128x128xbf16>
    %cst_42 = arith.constant dense<0.000000e+00> : vector<8x128xf32>
    %94 = tpu.matmul %92, %93, %cst_42 {dimension_numbers = #tpu.dot_dimension_numbers<[1], [0], [0], [1], [0, 0, 1, 1], [], []>} : vector<8x128xbf16>, vector<128x128xbf16>, vector<8x128xf32> -> vector<8x128xf32>
    %c0_43 = arith.constant 0 : index
    %c0_44 = arith.constant 0 : index
    %95 = vector.load %arg13[%c0_43, %c0_44] : memref<1x128xf32, #tpu.memory_space<vmem>>, vector<1x128xf32>
    %96 = vector.broadcast %95 : vector<1x128xf32> to vector<8x128xf32>
    %97 = arith.addf %94, %96 : vector<8x128xf32>
    %c0_45 = arith.constant 0 : index
    %c0_46 = arith.constant 0 : index
    %c0_47 = arith.constant 0 : index
    %98 = vector.load %arg18[%c0_45, %c0_46, %c0_47] : memref<1x8x128xf32, #tpu.memory_space<vmem>>, vector<1x8x128xf32>
    %99 = vector.shape_cast %98 : vector<1x8x128xf32> to vector<8x128xf32>
    %100 = vector.shape_cast %97 : vector<8x128xf32> to vector<1x8x128xf32>
    tpu.vector_store %arg18[%c0_45, %c0_46, %c0_47], %100 {strides = array<i32>} : memref<1x8x128xf32, #tpu.memory_space<vmem>>, vector<1x8x128xf32>,
    %101 = arith.truncf %49 : vector<16x128xf32> to vector<16x128xbf16>
    %c0_48 = arith.constant 0 : index
    %c0_49 = arith.constant 0 : index
    %102 = vector.load %arg14[%c0_48, %c0_49] : memref<128x256xbf16, #tpu.memory_space<vmem>>, vector<128x256xbf16>
    %cst_50 = arith.constant dense<0.000000e+00> : vector<16x256xf32>
    %103 = tpu.matmul %101, %102, %cst_50 {dimension_numbers = #tpu.dot_dimension_numbers<[1], [0], [0], [1], [0, 0, 1, 1], [], []>} : vector<16x128xbf16>, vector<128x256xbf16>, vector<16x256xf32> -> vector<16x256xf32>
    %c0_51 = arith.constant 0 : index
    %c0_52 = arith.constant 0 : index
    %104 = vector.load %arg15[%c0_51, %c0_52] : memref<1x256xf32, #tpu.memory_space<vmem>>, vector<1x256xf32>
    %105 = vector.broadcast %104 : vector<1x256xf32> to vector<16x256xf32>
    %106 = arith.addf %103, %105 : vector<16x256xf32>
    %cst_53 = arith.constant 0.000000e+00 : f32
    %107 = vector.broadcast %cst_53 : f32 to vector<16x256xf32>
    %108 = arith.maximumf %106, %107 : vector<16x256xf32>
    %109 = arith.truncf %108 : vector<16x256xf32> to vector<16x256xbf16>
    %c0_54 = arith.constant 0 : index
    %c0_55 = arith.constant 0 : index
    %110 = vector.load %arg16[%c0_54, %c0_55] : memref<256x128xbf16, #tpu.memory_space<vmem>>, vector<256x128xbf16>
    %cst_56 = arith.constant dense<0.000000e+00> : vector<16x128xf32>
    %111 = tpu.matmul %109, %110, %cst_56 {dimension_numbers = #tpu.dot_dimension_numbers<[1], [0], [0], [1], [0, 0, 1, 1], [], []>} : vector<16x256xbf16>, vector<256x128xbf16>, vector<16x128xf32> -> vector<16x128xf32>
    %c0_57 = arith.constant 0 : index
    %c0_58 = arith.constant 0 : index
    %112 = vector.load %arg17[%c0_57, %c0_58] : memref<1x128xf32, #tpu.memory_space<vmem>>, vector<1x128xf32>
    %113 = vector.broadcast %112 : vector<1x128xf32> to vector<16x128xf32>
    %114 = arith.addf %111, %113 : vector<16x128xf32>
    %c0_59 = arith.constant 0 : index
    %c0_60 = arith.constant 0 : index
    %c0_61 = arith.constant 0 : index
    %115 = vector.load %arg19[%c0_59, %c0_60, %c0_61] : memref<1x16x128xf32, #tpu.memory_space<vmem>>, vector<1x16x128xf32>
    %116 = vector.shape_cast %115 : vector<1x16x128xf32> to vector<16x128xf32>
    %117 = vector.shape_cast %114 : vector<16x128xf32> to vector<1x16x128xf32>
    tpu.vector_store %arg19[%c0_59, %c0_60, %c0_61], %117 {strides = array<i32>} : memref<1x16x128xf32, #tpu.memory_space<vmem>>, vector<1x16x128xf32>,
    return
  }
  func.func @transform_0(%arg0: i32) -> (i32, i32, i32) {
    %c0_i32 = arith.constant 0 : i32
    %c0_i32_0 = arith.constant 0 : i32
    %c0_i32_1 = arith.constant 0 : i32
    return %arg0, %c0_i32, %c0_i32_0 : i32, i32, i32
  }
  func.func @transform_1(%arg0: i32) -> (i32, i32, i32) {
    %c0_i32 = arith.constant 0 : i32
    %c0_i32_0 = arith.constant 0 : i32
    %c0_i32_1 = arith.constant 0 : i32
    return %arg0, %c0_i32, %c0_i32_0 : i32, i32, i32
  }
  func.func @transform_2(%arg0: i32) -> (i32, i32, i32) {
    %c0_i32 = arith.constant 0 : i32
    %c0_i32_0 = arith.constant 0 : i32
    %c0_i32_1 = arith.constant 0 : i32
    return %arg0, %c0_i32, %c0_i32_0 : i32, i32, i32
  }
  func.func @transform_3(%arg0: i32) -> (i32, i32) {
    %c0_i32 = arith.constant 0 : i32
    %c0_i32_0 = arith.constant 0 : i32
    %c0_i32_1 = arith.constant 0 : i32
    return %c0_i32, %c0_i32_0 : i32, i32
  }
  func.func @transform_4(%arg0: i32) -> (i32, i32) {
    %c0_i32 = arith.constant 0 : i32
    %c0_i32_0 = arith.constant 0 : i32
    %c0_i32_1 = arith.constant 0 : i32
    return %c0_i32, %c0_i32_0 : i32, i32
  }
  func.func @transform_5(%arg0: i32) -> (i32, i32) {
    %c0_i32 = arith.constant 0 : i32
    %c0_i32_0 = arith.constant 0 : i32
    %c0_i32_1 = arith.constant 0 : i32
    return %c0_i32, %c0_i32_0 : i32, i32
  }
  func.func @transform_6(%arg0: i32) -> (i32, i32) {
    %c0_i32 = arith.constant 0 : i32
    %c0_i32_0 = arith.constant 0 : i32
    %c0_i32_1 = arith.constant 0 : i32
    return %c0_i32, %c0_i32_0 : i32, i32
  }
  func.func @transform_7(%arg0: i32) -> (i32, i32) {
    %c0_i32 = arith.constant 0 : i32
    %c0_i32_0 = arith.constant 0 : i32
    %c0_i32_1 = arith.constant 0 : i32
    return %c0_i32, %c0_i32_0 : i32, i32
  }
  func.func @transform_8(%arg0: i32) -> (i32, i32) {
    %c0_i32 = arith.constant 0 : i32
    %c0_i32_0 = arith.constant 0 : i32
    %c0_i32_1 = arith.constant 0 : i32
    return %c0_i32, %c0_i32_0 : i32, i32
  }
  func.func @transform_9(%arg0: i32) -> (i32, i32) {
    %c0_i32 = arith.constant 0 : i32
    %c0_i32_0 = arith.constant 0 : i32
    %c0_i32_1 = arith.constant 0 : i32
    return %c0_i32, %c0_i32_0 : i32, i32
  }
  func.func @transform_10(%arg0: i32) -> (i32, i32) {
    %c0_i32 = arith.constant 0 : i32
    %c0_i32_0 = arith.constant 0 : i32
    %c0_i32_1 = arith.constant 0 : i32
    return %c0_i32, %c0_i32_0 : i32, i32
  }
  func.func @transform_11(%arg0: i32) -> (i32, i32) {
    %c0_i32 = arith.constant 0 : i32
    %c0_i32_0 = arith.constant 0 : i32
    %c0_i32_1 = arith.constant 0 : i32
    return %c0_i32, %c0_i32_0 : i32, i32
  }
  func.func @transform_12(%arg0: i32) -> (i32, i32) {
    %c0_i32 = arith.constant 0 : i32
    %c0_i32_0 = arith.constant 0 : i32
    %c0_i32_1 = arith.constant 0 : i32
    return %c0_i32, %c0_i32_0 : i32, i32
  }
  func.func @transform_13(%arg0: i32) -> (i32, i32) {
    %c0_i32 = arith.constant 0 : i32
    %c0_i32_0 = arith.constant 0 : i32
    %c0_i32_1 = arith.constant 0 : i32
    return %c0_i32, %c0_i32_0 : i32, i32
  }
  func.func @transform_14(%arg0: i32) -> (i32, i32) {
    %c0_i32 = arith.constant 0 : i32
    %c0_i32_0 = arith.constant 0 : i32
    %c0_i32_1 = arith.constant 0 : i32
    return %c0_i32, %c0_i32_0 : i32, i32
  }
  func.func @transform_15(%arg0: i32) -> (i32, i32) {
    %c0_i32 = arith.constant 0 : i32
    %c0_i32_0 = arith.constant 0 : i32
    %c0_i32_1 = arith.constant 0 : i32
    return %c0_i32, %c0_i32_0 : i32, i32
  }
  func.func @transform_16(%arg0: i32) -> (i32, i32) {
    %c0_i32 = arith.constant 0 : i32
    %c0_i32_0 = arith.constant 0 : i32
    %c0_i32_1 = arith.constant 0 : i32
    return %c0_i32, %c0_i32_0 : i32, i32
  }
  func.func @transform_17(%arg0: i32) -> (i32, i32, i32) {
    %c0_i32 = arith.constant 0 : i32
    %c0_i32_0 = arith.constant 0 : i32
    %c0_i32_1 = arith.constant 0 : i32
    return %arg0, %c0_i32, %c0_i32_0 : i32, i32, i32
  }
  func.func @transform_18(%arg0: i32) -> (i32, i32, i32) {
    %c0_i32 = arith.constant 0 : i32
    %c0_i32_0 = arith.constant 0 : i32
    %c0_i32_1 = arith.constant 0 : i32
    return %arg0, %c0_i32, %c0_i32_0 : i32, i32, i32
  }
}

</mosaic_0001>

<llo_original>
// kernel: tpu_custom_call.1
$region0: #{tpu_custom_call.1}
  #allocation0 [shape = 'u32[]', space=smem, size = 0x4, offset = 0x4, fixed_abs, tag = 'smem constant byte address 0x4 - core index']
  #allocation1 [shape = 'u32[144,128]{1,0:T(1,128)}', space=vmem, size = 0x12000, scoped, tag = 'internal scratch']
  %s0 = inlined_call_operand.vmem [shape: s32[4,128,1], index: 0, kind: input, shape index: {}]
  %s1 = inlined_call_operand.hbm [shape: f32[4,1,128], index: 1, kind: input, shape index: {}]
  %s2 = inlined_call_operand.vmem [shape: f32[4,8,16], index: 2, kind: input, shape index: {}]
  %s3 = inlined_call_operand.hbm [shape: bf16[64,128], index: 3, kind: input, shape index: {}]
  %s4 = inlined_call_operand.vmem [shape: f32[16,128], index: 4, kind: input, shape index: {}]
  %s5 = inlined_call_operand.hbm [shape: f32[8,128], index: 5, kind: input, shape index: {}]
  %s6 = inlined_call_operand.hbm [shape: f32[8,128], index: 6, kind: input, shape index: {}]
  %s7 = inlined_call_operand.vmem [shape: f32[32,8], index: 7, kind: input, shape index: {}]
  %s8 = inlined_call_operand.hbm [shape: f32[8,16], index: 8, kind: input, shape index: {}]
  %s9 = inlined_call_operand.vmem [shape: bf16[128,384], index: 9, kind: input, shape index: {}]
  %s10 = inlined_call_operand.hbm [shape: f32[1,384], index: 10, kind: input, shape index: {}]
  %s11 = inlined_call_operand.vmem [shape: bf16[128,128], index: 11, kind: input, shape index: {}]
  %s12 = inlined_call_operand.vmem [shape: f32[1,128], index: 12, kind: input, shape index: {}]
  %s13 = inlined_call_operand.vmem [shape: bf16[128,256], index: 13, kind: input, shape index: {}]
  %s14 = inlined_call_operand.vmem [shape: f32[1,256], index: 14, kind: input, shape index: {}]
  %s15 = inlined_call_operand.vmem [shape: bf16[256,128], index: 15, kind: input, shape index: {}]
  %s16 = inlined_call_operand.vmem [shape: f32[1,128], index: 16, kind: input, shape index: {}]
  %s17 = inlined_call_operand.hbm [shape: f32[4,8,128], index: 17, kind: output, shape index: {0}]
  %s18 = inlined_call_operand.hbm [shape: f32[4,16,128], index: 18, kind: output, shape index: {1}]
  %19 = xla_tuple %s17, %s18
  %s20 = sld [smem:[#allocation0]]
  $region133: #{tpu_custom_call.1} parent=0
    _
  %s22 = ssub.s32 1, %s20
  %s23 = scalar_select 0, %s22, %s20
  $region1: #{tpu_custom_call.1} parent=0
    #allocation2 [shape = 'u8[1024]{0}', space=vmem, size = 0x400, scoped, tag = 'input window, operand 1']
    #allocation3 [shape = 's32[2]{0}', space=sflag, size = 0x8, scoped, tag = 'scoped memory for tpu_custom_call.1']
    #allocation4 [shape = 's32[2]{0}', space=sflag, size = 0x8, scoped, tag = 'scoped memory for tpu_custom_call.1']
    #allocation5 [shape = 'u8[16384]{0}', space=vmem, size = 0x4000, scoped, tag = 'input window, operand 3, single buffered']
    #allocation6 [shape = 's32[1]{0}', space=sflag, size = 0x4, scoped, tag = 'scoped memory for tpu_custom_call.1']
    #allocation7 [shape = 'u8[4096]{0}', space=vmem, size = 0x1000, scoped, tag = 'input window, operand 5, single buffered']
    #allocation8 [shape = 'u8[4096]{0}', space=vmem, size = 0x1000, scoped, tag = 'input window, operand 6, single buffered']
    #allocation9 [shape = 's32[1]{0}', space=sflag, size = 0x4, scoped, tag = 'scoped memory for tpu_custom_call.1']
    #allocation10 [shape = 'u8[4096]{0}', space=vmem, size = 0x1000, scoped, tag = 'input window, operand 8, single buffered']
    #allocation11 [shape = 'u8[1536]{0}', space=vmem, size = 0x800, scoped, tag = 'input window, operand 10, single buffered']
    #allocation12 [shape = 's32[1]{0}', space=sflag, size = 0x4, scoped, tag = 'scoped memory for tpu_custom_call.1']
    #allocation13 [shape = 'u8[8192]{0}', space=vmem, size = 0x2000, scoped, tag = 'output window, operand 0']
    #allocation14 [shape = 'u8[16384]{0}', space=vmem, size = 0x4000, scoped, tag = 'output window, operand 1']
    #allocation15 [shape = 's32[2]{0}', space=sflag, size = 0x8, scoped, tag = 'scoped memory for tpu_custom_call.1']
    %24 = vsyncpa [#allocation3], 0
    %s25 = scalar_lea.sflag [#allocation3], 1
    %26 = vsyncpa %s25, 0
    %27 = vsyncpa [#allocation6], 0
    %28 = vsyncpa [#allocation9], 0
    %29 = vsyncpa [#allocation12], 0
    %30 = vsyncpa [#allocation4], 0
    %s31 = scalar_lea.sflag [#allocation4], 1
    %32 = vsyncpa %s31, 0
    %33 = vsyncpa [#allocation15], 0
    %s34 = scalar_lea.sflag [#allocation15], 1
    %35 = vsyncpa %s34, 0
    loop: start=0, step=1, limit=6
    $region2: #{tpu_custom_call.1} parent=1 // loop_pre_header
      _
    $region3: #{tpu_custom_call.1} parent=1 // loop_header
      %s37 = sphi 0, %s41
      %p38 = scmp.ge.s32.totalorder %s37, 6
      %s47 = sphi 0, %s49
      %s50 = sphi 0, %s47
      %s51 = sphi 0, %s50
      %s67 = sphi 0, %s51
      %s73 = sphi 0, %s75
      %s76 = sphi 0, %s73
      %s77 = sphi 0, %s76
      %s93 = sphi 0, %s77
      %s99 = sphi 0, %s101
      %s102 = sphi 0, %s99
      %s103 = sphi 0, %s102
      %s119 = sphi 0, %s103
      %s123 = sphi 0, %s123
      %s125 = sphi 0, %s123
      %s126 = sphi 0, %s125
      %s140 = sphi 0, %s126
      %s144 = sphi 0, %s144
      %s146 = sphi 0, %s144
      %s147 = sphi 0, %s146
      %s161 = sphi 0, %s147
      %s165 = sphi 0, %s165
      %s167 = sphi 0, %s165
      %s168 = sphi 0, %s167
      %s182 = sphi 0, %s168
      %s186 = sphi 0, %s186
      %s188 = sphi 0, %s186
      %s189 = sphi 0, %s188
      %s203 = sphi 0, %s189
      %s207 = sphi 0, %s207
      %s209 = sphi 0, %s207
      %s210 = sphi 0, %s209
      %s224 = sphi 0, %s210
      %s228 = sphi 0, %s228
      %s230 = sphi 0, %s228
      %s231 = sphi 0, %s230
      %s245 = sphi 0, %s231
      %s249 = sphi 0, %s249
      %s251 = sphi 0, %s249
      %s252 = sphi 0, %s251
      %s266 = sphi 0, %s252
      %s270 = sphi 0, %s270
      %s272 = sphi 0, %s270
      %s273 = sphi 0, %s272
      %s287 = sphi 0, %s273
      %s291 = sphi 0, %s291
      %s293 = sphi 0, %s291
      %s294 = sphi 0, %s293
      %s308 = sphi 0, %s294
      %s312 = sphi 0, %s312
      %s314 = sphi 0, %s312
      %s315 = sphi 0, %s314
      %s329 = sphi 0, %s315
      %s333 = sphi 0, %s333
      %s335 = sphi 0, %s333
      %s336 = sphi 0, %s335
      %s350 = sphi 0, %s336
      %s354 = sphi 0, %s354
      %s356 = sphi 0, %s354
      %s357 = sphi 0, %s356
      %s371 = sphi 0, %s357
      %s375 = sphi 0, %s375
      %s377 = sphi 0, %s375
      %s378 = sphi 0, %s377
      %s392 = sphi 0, %s378
      %s396 = sphi 0, %s396
      %s398 = sphi 0, %s396
      %s399 = sphi 0, %s398
      %s413 = sphi 0, %s399
      %s419 = sphi 0, %s421
      %s422 = sphi 0, %s419
      %s423 = sphi 0, %s422
      %s439 = sphi 0, %s423
      %s445 = sphi 0, %s447
      %s448 = sphi 0, %s445
      %s449 = sphi 0, %s448
      %s465 = sphi 0, %s449
    $region4: #{tpu_custom_call.1} parent=1 // loop_header_branch
      %40 = sbr.rel (%p38) target = $region8
    $region5: #{tpu_custom_call.1} parent=1 // loop_body
      %s42 = ssub.s32 %s37, 1
      %s43 = ssub.s32 %s37, 2
      %s44 = sadd.s32 %s37, 1
      %s45 = ssub.s32 %s37, %s44
      %p46 = scmp.eq.s32.totalorder %s45, 0
      %s48 = sadd.s32 %s47, 1
      %s49 = scalar_select %p46, %s47, %s48
      %p52 = pneg %p46
      %p53 = scmp.eq.s32.totalorder %s37, 3
      %p54 = por %p52, %p53
      %p55 = scmp.ne.s32.totalorder %s47, %s50
      %p56 = scmp.eq.s32.totalorder %s37, 0
      %p57 = por %p55, %p56
      %p58 = scmp.ne.s32.totalorder %s47, %s50
      %p59 = scmp.eq.s32.totalorder %s42, 3
      %p60 = por %p58, %p59
      %p61 = scmp.ne.s32.totalorder %s50, %s51
      %p62 = scmp.eq.s32.totalorder %s42, 0
      %p63 = por %p61, %p62
      %p64 = scmp.ne.s32.totalorder %s50, %s51
      %p65 = scmp.eq.s32.totalorder %s43, 3
      %p66 = por %p64, %p65
      %p68 = scmp.ne.s32.totalorder %s51, %s67
      %p69 = scmp.eq.s32.totalorder %s43, 0
      %p70 = por %p68, %p69
      %s71 = ssub.s32 %s37, %s44
      %p72 = scmp.eq.s32.totalorder %s71, 0
      %s74 = sadd.s32 %s73, 1
      %s75 = scalar_select %p72, %s73, %s74
      %p78 = pneg %p72
      %p79 = scmp.eq.s32.totalorder %s37, 3
      %p80 = por %p78, %p79
      %p81 = scmp.ne.s32.totalorder %s73, %s76
      %p82 = scmp.eq.s32.totalorder %s37, 0
      %p83 = por %p81, %p82
      %p84 = scmp.ne.s32.totalorder %s73, %s76
      %p85 = scmp.eq.s32.totalorder %s42, 3
      %p86 = por %p84, %p85
      %p87 = scmp.ne.s32.totalorder %s76, %s77
      %p88 = scmp.eq.s32.totalorder %s42, 0
      %p89 = por %p87, %p88
      %p90 = scmp.ne.s32.totalorder %s76, %s77
      %p91 = scmp.eq.s32.totalorder %s43, 3
      %p92 = por %p90, %p91
      %p94 = scmp.ne.s32.totalorder %s77, %s93
      %p95 = scmp.eq.s32.totalorder %s43, 0
      %p96 = por %p94, %p95
      %s97 = ssub.s32 %s37, %s44
      %p98 = scmp.eq.s32.totalorder %s97, 0
      %s100 = sadd.s32 %s99, 1
      %s101 = scalar_select %p98, %s99, %s100
      %p104 = pneg %p98
      %p105 = scmp.eq.s32.totalorder %s37, 3
      %p106 = por %p104, %p105
      %p107 = scmp.ne.s32.totalorder %s99, %s102
      %p108 = scmp.eq.s32.totalorder %s37, 0
      %p109 = por %p107, %p108
      %p110 = scmp.ne.s32.totalorder %s99, %s102
      %p111 = scmp.eq.s32.totalorder %s42, 3
      %p112 = por %p110, %p111
      %p113 = scmp.ne.s32.totalorder %s102, %s103
      %p114 = scmp.eq.s32.totalorder %s42, 0
      %p115 = por %p113, %p114
      %p116 = scmp.ne.s32.totalorder %s102, %s103
      %p117 = scmp.eq.s32.totalorder %s43, 3
      %p118 = por %p116, %p117
      %p120 = scmp.ne.s32.totalorder %s103, %s119
      %p121 = scmp.eq.s32.totalorder %s43, 0
      %p122 = por %p120, %p121
      %s124 = sadd.s32 %s123, 1
      %p127 = scmp.eq.s32.totalorder %s37, 3
      %p128 = scmp.ne.s32.totalorder %s123, %s125
      %p129 = scmp.eq.s32.totalorder %s37, 0
      %p130 = por %p128, %p129
      %p131 = scmp.ne.s32.totalorder %s123, %s125
      %p132 = scmp.eq.s32.totalorder %s42, 3
      %p133 = por %p131, %p132
      %p134 = scmp.ne.s32.totalorder %s125, %s126
      %p135 = scmp.eq.s32.totalorder %s42, 0
      %p136 = por %p134, %p135
      %p137 = scmp.ne.s32.totalorder %s125, %s126
      %p138 = scmp.eq.s32.totalorder %s43, 3
      %p139 = por %p137, %p138
      %p141 = scmp.ne.s32.totalorder %s126, %s140
      %p142 = scmp.eq.s32.totalorder %s43, 0
      %p143 = por %p141, %p142
      %s145 = sadd.s32 %s144, 1
      %p148 = scmp.eq.s32.totalorder %s37, 3
      %p149 = scmp.ne.s32.totalorder %s144, %s146
      %p150 = scmp.eq.s32.totalorder %s37, 0
      %p151 = por %p149, %p150
      %p152 = scmp.ne.s32.totalorder %s144, %s146
      %p153 = scmp.eq.s32.totalorder %s42, 3
      %p154 = por %p152, %p153
      %p155 = scmp.ne.s32.totalorder %s146, %s147
      %p156 = scmp.eq.s32.totalorder %s42, 0
      %p157 = por %p155, %p156
      %p158 = scmp.ne.s32.totalorder %s146, %s147
      %p159 = scmp.eq.s32.totalorder %s43, 3
      %p160 = por %p158, %p159
      %p162 = scmp.ne.s32.totalorder %s147, %s161
      %p163 = scmp.eq.s32.totalorder %s43, 0
      %p164 = por %p162, %p163
      %s166 = sadd.s32 %s165, 1
      %p169 = scmp.eq.s32.totalorder %s37, 3
      %p170 = scmp.ne.s32.totalorder %s165, %s167
      %p171 = scmp.eq.s32.totalorder %s37, 0
      %p172 = por %p170, %p171
      %p173 = scmp.ne.s32.totalorder %s165, %s167
      %p174 = scmp.eq.s32.totalorder %s42, 3
      %p175 = por %p173, %p174
      %p176 = scmp.ne.s32.totalorder %s167, %s168
      %p177 = scmp.eq.s32.totalorder %s42, 0
      %p178 = por %p176, %p177
      %p179 = scmp.ne.s32.totalorder %s167, %s168
      %p180 = scmp.eq.s32.totalorder %s43, 3
      %p181 = por %p179, %p180
      %p183 = scmp.ne.s32.totalorder %s168, %s182
      %p184 = scmp.eq.s32.totalorder %s43, 0
      %p185 = por %p183, %p184
      %s187 = sadd.s32 %s186, 1
      %p190 = scmp.eq.s32.totalorder %s37, 3
      %p191 = scmp.ne.s32.totalorder %s186, %s188
      %p192 = scmp.eq.s32.totalorder %s37, 0
      %p193 = por %p191, %p192
      %p194 = scmp.ne.s32.totalorder %s186, %s188
      %p195 = scmp.eq.s32.totalorder %s42, 3
      %p196 = por %p194, %p195
      %p197 = scmp.ne.s32.totalorder %s188, %s189
      %p198 = scmp.eq.s32.totalorder %s42, 0
      %p199 = por %p197, %p198
      %p200 = scmp.ne.s32.totalorder %s188, %s189
      %p201 = scmp.eq.s32.totalorder %s43, 3
      %p202 = por %p200, %p201
      %p204 = scmp.ne.s32.totalorder %s189, %s203
      %p205 = scmp.eq.s32.totalorder %s43, 0
      %p206 = por %p204, %p205
      %s208 = sadd.s32 %s207, 1
      %p211 = scmp.eq.s32.totalorder %s37, 3
      %p212 = scmp.ne.s32.totalorder %s207, %s209
      %p213 = scmp.eq.s32.totalorder %s37, 0
      %p214 = por %p212, %p213
      %p215 = scmp.ne.s32.totalorder %s207, %s209
      %p216 = scmp.eq.s32.totalorder %s42, 3
      %p217 = por %p215, %p216
      %p218 = scmp.ne.s32.totalorder %s209, %s210
      %p219 = scmp.eq.s32.totalorder %s42, 0
      %p220 = por %p218, %p219
      %p221 = scmp.ne.s32.totalorder %s209, %s210
      %p222 = scmp.eq.s32.totalorder %s43, 3
      %p223 = por %p221, %p222
      %p225 = scmp.ne.s32.totalorder %s210, %s224
      %p226 = scmp.eq.s32.totalorder %s43, 0
      %p227 = por %p225, %p226
      %s229 = sadd.s32 %s228, 1
      %p232 = scmp.eq.s32.totalorder %s37, 3
      %p233 = scmp.ne.s32.totalorder %s228, %s230
      %p234 = scmp.eq.s32.totalorder %s37, 0
      %p235 = por %p233, %p234
      %p236 = scmp.ne.s32.totalorder %s228, %s230
      %p237 = scmp.eq.s32.totalorder %s42, 3
      %p238 = por %p236, %p237
      %p239 = scmp.ne.s32.totalorder %s230, %s231
      %p240 = scmp.eq.s32.totalorder %s42, 0
      %p241 = por %p239, %p240
      %p242 = scmp.ne.s32.totalorder %s230, %s231
      %p243 = scmp.eq.s32.totalorder %s43, 3
      %p244 = por %p242, %p243
      %p246 = scmp.ne.s32.totalorder %s231, %s245
      %p247 = scmp.eq.s32.totalorder %s43, 0
      %p248 = por %p246, %p247
      %s250 = sadd.s32 %s249, 1
      %p253 = scmp.eq.s32.totalorder %s37, 3
      %p254 = scmp.ne.s32.totalorder %s249, %s251
      %p255 = scmp.eq.s32.totalorder %s37, 0
      %p256 = por %p254, %p255
      %p257 = scmp.ne.s32.totalorder %s249, %s251
      %p258 = scmp.eq.s32.totalorder %s42, 3
      %p259 = por %p257, %p258
      %p260 = scmp.ne.s32.totalorder %s251, %s252
      %p261 = scmp.eq.s32.totalorder %s42, 0
      %p262 = por %p260, %p261
      %p263 = scmp.ne.s32.totalorder %s251, %s252
      %p264 = scmp.eq.s32.totalorder %s43, 3
      %p265 = por %p263, %p264
      %p267 = scmp.ne.s32.totalorder %s252, %s266
      %p268 = scmp.eq.s32.totalorder %s43, 0
      %p269 = por %p267, %p268
      %s271 = sadd.s32 %s270, 1
      %p274 = scmp.eq.s32.totalorder %s37, 3
      %p275 = scmp.ne.s32.totalorder %s270, %s272
      %p276 = scmp.eq.s32.totalorder %s37, 0
      %p277 = por %p275, %p276
      %p278 = scmp.ne.s32.totalorder %s270, %s272
      %p279 = scmp.eq.s32.totalorder %s42, 3
      %p280 = por %p278, %p279
      %p281 = scmp.ne.s32.totalorder %s272, %s273
      %p282 = scmp.eq.s32.totalorder %s42, 0
      %p283 = por %p281, %p282
      %p284 = scmp.ne.s32.totalorder %s272, %s273
      %p285 = scmp.eq.s32.totalorder %s43, 3
      %p286 = por %p284, %p285
      %p288 = scmp.ne.s32.totalorder %s273, %s287
      %p289 = scmp.eq.s32.totalorder %s43, 0
      %p290 = por %p288, %p289
      %s292 = sadd.s32 %s291, 1
      %p295 = scmp.eq.s32.totalorder %s37, 3
      %p296 = scmp.ne.s32.totalorder %s291, %s293
      %p297 = scmp.eq.s32.totalorder %s37, 0
      %p298 = por %p296, %p297
      %p299 = scmp.ne.s32.totalorder %s291, %s293
      %p300 = scmp.eq.s32.totalorder %s42, 3
      %p301 = por %p299, %p300
      %p302 = scmp.ne.s32.totalorder %s293, %s294
      %p303 = scmp.eq.s32.totalorder %s42, 0
      %p304 = por %p302, %p303
      %p305 = scmp.ne.s32.totalorder %s293, %s294
      %p306 = scmp.eq.s32.totalorder %s43, 3
      %p307 = por %p305, %p306
      %p309 = scmp.ne.s32.totalorder %s294, %s308
      %p310 = scmp.eq.s32.totalorder %s43, 0
      %p311 = por %p309, %p310
      %s313 = sadd.s32 %s312, 1
      %p316 = scmp.eq.s32.totalorder %s37, 3
      %p317 = scmp.ne.s32.totalorder %s312, %s314
      %p318 = scmp.eq.s32.totalorder %s37, 0
      %p319 = por %p317, %p318
      %p320 = scmp.ne.s32.totalorder %s312, %s314
      %p321 = scmp.eq.s32.totalorder %s42, 3
      %p322 = por %p320, %p321
      %p323 = scmp.ne.s32.totalorder %s314, %s315
      %p324 = scmp.eq.s32.totalorder %s42, 0
      %p325 = por %p323, %p324
      %p326 = scmp.ne.s32.totalorder %s314, %s315
      %p327 = scmp.eq.s32.totalorder %s43, 3
      %p328 = por %p326, %p327
      %p330 = scmp.ne.s32.totalorder %s315, %s329
      %p331 = scmp.eq.s32.totalorder %s43, 0
      %p332 = por %p330, %p331
      %s334 = sadd.s32 %s333, 1
      %p337 = scmp.eq.s32.totalorder %s37, 3
      %p338 = scmp.ne.s32.totalorder %s333, %s335
      %p339 = scmp.eq.s32.totalorder %s37, 0
      %p340 = por %p338, %p339
      %p341 = scmp.ne.s32.totalorder %s333, %s335
      %p342 = scmp.eq.s32.totalorder %s42, 3
      %p343 = por %p341, %p342
      %p344 = scmp.ne.s32.totalorder %s335, %s336
      %p345 = scmp.eq.s32.totalorder %s42, 0
      %p346 = por %p344, %p345
      %p347 = scmp.ne.s32.totalorder %s335, %s336
      %p348 = scmp.eq.s32.totalorder %s43, 3
      %p349 = por %p347, %p348
      %p351 = scmp.ne.s32.totalorder %s336, %s350
      %p352 = scmp.eq.s32.totalorder %s43, 0
      %p353 = por %p351, %p352
      %s355 = sadd.s32 %s354, 1
      %p358 = scmp.eq.s32.totalorder %s37, 3
      %p359 = scmp.ne.s32.totalorder %s354, %s356
      %p360 = scmp.eq.s32.totalorder %s37, 0
      %p361 = por %p359, %p360
      %p362 = scmp.ne.s32.totalorder %s354, %s356
      %p363 = scmp.eq.s32.totalorder %s42, 3
      %p364 = por %p362, %p363
      %p365 = scmp.ne.s32.totalorder %s356, %s357
      %p366 = scmp.eq.s32.totalorder %s42, 0
      %p367 = por %p365, %p366
      %p368 = scmp.ne.s32.totalorder %s356, %s357
      %p369 = scmp.eq.s32.totalorder %s43, 3
      %p370 = por %p368, %p369
      %p372 = scmp.ne.s32.totalorder %s357, %s371
      %p373 = scmp.eq.s32.totalorder %s43, 0
      %p374 = por %p372, %p373
      %s376 = sadd.s32 %s375, 1
      %p379 = scmp.eq.s32.totalorder %s37, 3
      %p380 = scmp.ne.s32.totalorder %s375, %s377
      %p381 = scmp.eq.s32.totalorder %s37, 0
      %p382 = por %p380, %p381
      %p383 = scmp.ne.s32.totalorder %s375, %s377
      %p384 = scmp.eq.s32.totalorder %s42, 3
      %p385 = por %p383, %p384
      %p386 = scmp.ne.s32.totalorder %s377, %s378
      %p387 = scmp.eq.s32.totalorder %s42, 0
      %p388 = por %p386, %p387
      %p389 = scmp.ne.s32.totalorder %s377, %s378
      %p390 = scmp.eq.s32.totalorder %s43, 3
      %p391 = por %p389, %p390
      %p393 = scmp.ne.s32.totalorder %s378, %s392
      %p394 = scmp.eq.s32.totalorder %s43, 0
      %p395 = por %p393, %p394
      %s397 = sadd.s32 %s396, 1
      %p400 = scmp.eq.s32.totalorder %s37, 3
      %p401 = scmp.ne.s32.totalorder %s396, %s398
      %p402 = scmp.eq.s32.totalorder %s37, 0
      %p403 = por %p401, %p402
      %p404 = scmp.ne.s32.totalorder %s396, %s398
      %p405 = scmp.eq.s32.totalorder %s42, 3
      %p406 = por %p404, %p405
      %p407 = scmp.ne.s32.totalorder %s398, %s399
      %p408 = scmp.eq.s32.totalorder %s42, 0
      %p409 = por %p407, %p408
      %p410 = scmp.ne.s32.totalorder %s398, %s399
      %p411 = scmp.eq.s32.totalorder %s43, 3
      %p412 = por %p410, %p411
      %p414 = scmp.ne.s32.totalorder %s399, %s413
      %p415 = scmp.eq.s32.totalorder %s43, 0
      %p416 = por %p414, %p415
      %s417 = ssub.s32 %s37, %s44
      %p418 = scmp.eq.s32.totalorder %s417, 0
      %s420 = sadd.s32 %s419, 1
      %s421 = scalar_select %p418, %s419, %s420
      %p424 = pneg %p418
      %p425 = scmp.eq.s32.totalorder %s37, 3
      %p426 = por %p424, %p425
      %p427 = scmp.ne.s32.totalorder %s419, %s422
      %p428 = scmp.eq.s32.totalorder %s37, 0
      %p429 = por %p427, %p428
      %p430 = scmp.ne.s32.totalorder %s419, %s422
      %p431 = scmp.eq.s32.totalorder %s42, 3
      %p432 = por %p430, %p431
      %p433 = scmp.ne.s32.totalorder %s422, %s423
      %p434 = scmp.eq.s32.totalorder %s42, 0
      %p435 = por %p433, %p434
      %p436 = scmp.ne.s32.totalorder %s422, %s423
      %p437 = scmp.eq.s32.totalorder %s43, 3
      %p438 = por %p436, %p437
      %p440 = scmp.ne.s32.totalorder %s423, %s439
      %p441 = scmp.eq.s32.totalorder %s43, 0
      %p442 = por %p440, %p441
      %s443 = ssub.s32 %s37, %s44
      %p444 = scmp.eq.s32.totalorder %s443, 0
      %s446 = sadd.s32 %s445, 1
      %s447 = scalar_select %p444, %s445, %s446
      %p450 = pneg %p444
      %p451 = scmp.eq.s32.totalorder %s37, 3
      %p452 = por %p450, %p451
      %p453 = scmp.ne.s32.totalorder %s445, %s448
      %p454 = scmp.eq.s32.totalorder %s37, 0
      %p455 = por %p453, %p454
      %p456 = scmp.ne.s32.totalorder %s445, %s448
      %p457 = scmp.eq.s32.totalorder %s42, 3
      %p458 = por %p456, %p457
      %p459 = scmp.ne.s32.totalorder %s448, %s449
      %p460 = scmp.eq.s32.totalorder %s42, 0
      %p461 = por %p459, %p460
      %p462 = scmp.ne.s32.totalorder %s448, %s449
      %p463 = scmp.eq.s32.totalorder %s43, 3
      %p464 = por %p462, %p463
      %p466 = scmp.ne.s32.totalorder %s449, %s465
      %p467 = scmp.eq.s32.totalorder %s43, 0
      %p468 = por %p466, %p467
      %p469 = scmp.le.s32.totalorder 1, %s37
      %p470 = scmp.lt.s32.totalorder %s37, 5
      %p471 = pnand %p469, %p470
      %p472 = pneg %p471
      // Predicated region
      $region9: #{tpu_custom_call.1} parent=5 // pred_check
        _
      $region10: #{tpu_custom_call.1} parent=5 // pred_check_branch
        %474 = sbr.rel (%p471) target = $region12
      $region11: #{tpu_custom_call.1} parent=5 // pred_region
        %s475 = ssub.s32 %s37, 1
        // Predicated region
        $region13: #{tpu_custom_call.1} parent=11 // pred_check
          %p476 = pneg %p136
        $region14: #{tpu_custom_call.1} parent=11 // pred_check_branch
          %478 = sbr.rel (%p476) target = $region16
        $region15: #{tpu_custom_call.1} parent=11 // pred_region
          %s480 = ssub.s32 512, 512
          %481 = vsyncadd [#allocation6], %s480
          %s482 = sshll.u32 [#allocation5], 4
          %s483 = int_to_ptr.vmem [resolvable:$true] %s482
          %488 = dma.hbm_to_vmem [thread:$0]  %s3, 512, %s483, [#allocation6], 64, 64, 4
        $region16: #{tpu_custom_call.1} parent=11 // pred_fallthru
          _
        // Predicated region
        $region17: #{tpu_custom_call.1} parent=11 // pred_check
          %p489 = pneg %p157
        $region18: #{tpu_custom_call.1} parent=11 // pred_check_branch
          %491 = sbr.rel (%p489) target = $region20
        $region19: #{tpu_custom_call.1} parent=11 // pred_region
          _
        $region20: #{tpu_custom_call.1} parent=11 // pred_fallthru
          _
        // Predicated region
        $region21: #{tpu_custom_call.1} parent=11 // pred_check
          %p492 = pneg %p178
        $region22: #{tpu_custom_call.1} parent=11 // pred_check_branch
          %494 = sbr.rel (%p492) target = $region24
        $region23: #{tpu_custom_call.1} parent=11 // pred_region
          %s496 = ssub.s32 128, 128
          %497 = vsyncadd [#allocation6], %s496
          %s499 = sshll.u32 [#allocation7], 4
          %s500 = int_to_ptr.vmem [resolvable:$true] %s499
          %502 = dma.hbm_to_vmem [thread:$0]  %s5, 128, %s500, [#allocation6]
        $region24: #{tpu_custom_call.1} parent=11 // pred_fallthru
          _
        // Predicated region
        $region25: #{tpu_custom_call.1} parent=11 // pred_check
          %p503 = pneg %p199
        $region26: #{tpu_custom_call.1} parent=11 // pred_check_branch
          %505 = sbr.rel (%p503) target = $region28
        $region27: #{tpu_custom_call.1} parent=11 // pred_region
          %s507 = ssub.s32 128, 128
          %508 = vsyncadd [#allocation9], %s507
          %s510 = sshll.u32 [#allocation8], 4
          %s511 = int_to_ptr.vmem [resolvable:$true] %s510
          %513 = dma.hbm_to_vmem [thread:$0]  %s6, 128, %s511, [#allocation9]
        $region28: #{tpu_custom_call.1} parent=11 // pred_fallthru
          _
        // Predicated region
        $region29: #{tpu_custom_call.1} parent=11 // pred_check
          %p514 = pneg %p220
        $region30: #{tpu_custom_call.1} parent=11 // pred_check_branch
          %516 = sbr.rel (%p514) target = $region32
        $region31: #{tpu_custom_call.1} parent=11 // pred_region
          _
        $region32: #{tpu_custom_call.1} parent=11 // pred_fallthru
          _
        // Predicated region
        $region33: #{tpu_custom_call.1} parent=11 // pred_check
          %p517 = pneg %p241
        $region34: #{tpu_custom_call.1} parent=11 // pred_check_branch
          %519 = sbr.rel (%p517) target = $region36
        $region35: #{tpu_custom_call.1} parent=11 // pred_region
          %s521 = ssub.s32 128, 128
          %522 = vsyncadd [#allocation9], %s521
          %s524 = sshll.u32 [#allocation10], 4
          %s525 = int_to_ptr.vmem [resolvable:$true] %s524
          %527 = dma.hbm_to_vmem [thread:$0]  %s8, 128, %s525, [#allocation9]
        $region36: #{tpu_custom_call.1} parent=11 // pred_fallthru
          _
        // Predicated region
        $region37: #{tpu_custom_call.1} parent=11 // pred_check
          %p528 = pneg %p262
        $region38: #{tpu_custom_call.1} parent=11 // pred_check_branch
          %530 = sbr.rel (%p528) target = $region40
        $region39: #{tpu_custom_call.1} parent=11 // pred_region
          _
        $region40: #{tpu_custom_call.1} parent=11 // pred_fallthru
          _
        // Predicated region
        $region41: #{tpu_custom_call.1} parent=11 // pred_check
          %p531 = pneg %p283
        $region42: #{tpu_custom_call.1} parent=11 // pred_check_branch
          %533 = sbr.rel (%p531) target = $region44
        $region43: #{tpu_custom_call.1} parent=11 // pred_region
          %s535 = ssub.s32 48, 48
          %536 = vsyncadd [#allocation12], %s535
          %s538 = sshll.u32 [#allocation11], 4
          %s539 = int_to_ptr.vmem [resolvable:$true] %s538
          %541 = dma.hbm_to_vmem [thread:$0]  %s10, 48, %s539, [#allocation12]
        $region44: #{tpu_custom_call.1} parent=11 // pred_fallthru
          _
        // Predicated region
        $region45: #{tpu_custom_call.1} parent=11 // pred_check
          %p542 = pneg %p304
        $region46: #{tpu_custom_call.1} parent=11 // pred_check_branch
          %544 = sbr.rel (%p542) target = $region48
        $region47: #{tpu_custom_call.1} parent=11 // pred_region
          _
        $region48: #{tpu_custom_call.1} parent=11 // pred_fallthru
          _
        // Predicated region
        $region49: #{tpu_custom_call.1} parent=11 // pred_check
          %p545 = pneg %p325
        $region50: #{tpu_custom_call.1} parent=11 // pred_check_branch
          %547 = sbr.rel (%p545) target = $region52
        $region51: #{tpu_custom_call.1} parent=11 // pred_region
          _
        $region52: #{tpu_custom_call.1} parent=11 // pred_fallthru
          _
        // Predicated region
        $region53: #{tpu_custom_call.1} parent=11 // pred_check
          %p548 = pneg %p346
        $region54: #{tpu_custom_call.1} parent=11 // pred_check_branch
          %550 = sbr.rel (%p548) target = $region56
        $region55: #{tpu_custom_call.1} parent=11 // pred_region
          _
        $region56: #{tpu_custom_call.1} parent=11 // pred_fallthru
          _
        // Predicated region
        $region57: #{tpu_custom_call.1} parent=11 // pred_check
          %p551 = pneg %p367
        $region58: #{tpu_custom_call.1} parent=11 // pred_check_branch
          %553 = sbr.rel (%p551) target = $region60
        $region59: #{tpu_custom_call.1} parent=11 // pred_region
          _
        $region60: #{tpu_custom_call.1} parent=11 // pred_fallthru
          _
        // Predicated region
        $region61: #{tpu_custom_call.1} parent=11 // pred_check
          %p554 = pneg %p388
        $region62: #{tpu_custom_call.1} parent=11 // pred_check_branch
          %556 = sbr.rel (%p554) target = $region64
        $region63: #{tpu_custom_call.1} parent=11 // pred_region
          _
        $region64: #{tpu_custom_call.1} parent=11 // pred_fallthru
          _
        // Predicated region
        $region65: #{tpu_custom_call.1} parent=11 // pred_check
          %p557 = pneg %p409
        $region66: #{tpu_custom_call.1} parent=11 // pred_check_branch
          %559 = sbr.rel (%p557) target = $region68
        $region67: #{tpu_custom_call.1} parent=11 // pred_region
          _
        $region68: #{tpu_custom_call.1} parent=11 // pred_fallthru
          _
      $region12: #{tpu_custom_call.1} parent=5 // pred_fallthru
        _
      %p560 = scmp.lt.s32.totalorder %s37, 4
      // Predicated region
      $region69: #{tpu_custom_call.1} parent=5 // pred_check
        %p561 = pneg %p560
      $region70: #{tpu_custom_call.1} parent=5 // pred_check_branch
        %563 = sbr.rel (%p561) target = $region72
      $region71: #{tpu_custom_call.1} parent=5 // pred_region
        // Predicated region
        $region73: #{tpu_custom_call.1} parent=71 // pred_check
          %p564 = pneg %p57
        $region74: #{tpu_custom_call.1} parent=71 // pred_check_branch
          %566 = sbr.rel (%p564) target = $region76
        $region75: #{tpu_custom_call.1} parent=71 // pred_region
          %p567 = scmp.lt.s32.totalorder %s37, 3
          %s568 = scalar_select %p567, %s37, 3
          %s569 = smul.addr %s568, 16
          %s570 = smul.addr %s569, 8
          %s571 = scalar_lea.vmem %s0, %s570
        $region76: #{tpu_custom_call.1} parent=71 // pred_fallthru
          _
        // Predicated region
        $region77: #{tpu_custom_call.1} parent=71 // pred_check
          %p572 = pneg %p83
        $region78: #{tpu_custom_call.1} parent=71 // pred_check_branch
          %574 = sbr.rel (%p572) target = $region80
        $region79: #{tpu_custom_call.1} parent=71 // pred_region
          %s575 = sand.u32 %s73, 1
          %s576 = scalar_lea.sflag [#allocation3], %s575
          %s577 = sand.u32 %s73, 1
          %s578 = scalar_lea.vmem [#allocation2], %s577
          %s580 = ssub.s32 16, 16
          %581 = vsyncadd %s576, %s580
          %s582 = smul.addr %s37, 16
          %s583 = scalar_lea.hbm %s1, %s582
          %s585 = sshll.u32 %s578, 4
          %s586 = int_to_ptr.vmem [resolvable:$true] %s585
          %588 = dma.hbm_to_vmem [thread:$0]  %s583, 16, %s586, %s576
        $region80: #{tpu_custom_call.1} parent=71 // pred_fallthru
          _
        // Predicated region
        $region81: #{tpu_custom_call.1} parent=71 // pred_check
          %p589 = pneg %p109
        $region82: #{tpu_custom_call.1} parent=71 // pred_check_branch
          %591 = sbr.rel (%p589) target = $region84
        $region83: #{tpu_custom_call.1} parent=71 // pred_region
          %p592 = scmp.lt.s32.totalorder %s37, 3
          %s593 = scalar_select %p592, %s37, 3
          %s594 = smul.addr %s593, 8
          %s595 = scalar_lea.vmem %s2, %s594
        $region84: #{tpu_custom_call.1} parent=71 // pred_fallthru
          _
      $region72: #{tpu_custom_call.1} parent=5 // pred_fallthru
        _
      %p596 = scmp.le.s32.totalorder 1, %s37
      %p597 = scmp.lt.s32.totalorder %s37, 5
      %p598 = pnand %p596, %p597
      %p599 = pneg %p598
      // Predicated region
      $region85: #{tpu_custom_call.1} parent=5 // pred_check
        _
      $region86: #{tpu_custom_call.1} parent=5 // pred_check_branch
        %601 = sbr.rel (%p598) target = $region88
      $region87: #{tpu_custom_call.1} parent=5 // pred_region
        %s602 = ssub.s32 %s37, 1
        %s603 = sand.u32 %s76, 1
        %s604 = scalar_lea.sflag [#allocation3], %s603
        %s605 = sand.u32 %s76, 1
        %s606 = scalar_lea.vmem [#allocation2], %s605
        // Predicated region
        $region89: #{tpu_custom_call.1} parent=87 // pred_check
          %p607 = pneg %p89
        $region90: #{tpu_custom_call.1} parent=87 // pred_check_branch
          %609 = sbr.rel (%p607) target = $region92
        $region91: #{tpu_custom_call.1} parent=87 // pred_region
          %610 = dma.done %s604, 16
        $region92: #{tpu_custom_call.1} parent=87 // pred_fallthru
          _
        // Predicated region
        $region93: #{tpu_custom_call.1} parent=87 // pred_check
          %p611 = pneg %p136
        $region94: #{tpu_custom_call.1} parent=87 // pred_check_branch
          %613 = sbr.rel (%p611) target = $region96
        $region95: #{tpu_custom_call.1} parent=87 // pred_region
          %614 = dma.done [#allocation6], 512
        $region96: #{tpu_custom_call.1} parent=87 // pred_fallthru
          _
        // Predicated region
        $region97: #{tpu_custom_call.1} parent=87 // pred_check
          %p615 = pneg %p178
        $region98: #{tpu_custom_call.1} parent=87 // pred_check_branch
          %617 = sbr.rel (%p615) target = $region100
        $region99: #{tpu_custom_call.1} parent=87 // pred_region
          %618 = dma.done [#allocation6], 128
        $region100: #{tpu_custom_call.1} parent=87 // pred_fallthru
          _
        // Predicated region
        $region101: #{tpu_custom_call.1} parent=87 // pred_check
          %p619 = pneg %p199
        $region102: #{tpu_custom_call.1} parent=87 // pred_check_branch
          %621 = sbr.rel (%p619) target = $region104
        $region103: #{tpu_custom_call.1} parent=87 // pred_region
          %622 = dma.done [#allocation9], 128
        $region104: #{tpu_custom_call.1} parent=87 // pred_fallthru
          _
        // Predicated region
        $region105: #{tpu_custom_call.1} parent=87 // pred_check
          %p623 = pneg %p241
        $region106: #{tpu_custom_call.1} parent=87 // pred_check_branch
          %625 = sbr.rel (%p623) target = $region108
        $region107: #{tpu_custom_call.1} parent=87 // pred_region
          %626 = dma.done [#allocation9], 128
        $region108: #{tpu_custom_call.1} parent=87 // pred_fallthru
          _
        // Predicated region
        $region109: #{tpu_custom_call.1} parent=87 // pred_check
          %p627 = pneg %p283
        $region110: #{tpu_custom_call.1} parent=87 // pred_check_branch
          %629 = sbr.rel (%p627) target = $region112
        $region111: #{tpu_custom_call.1} parent=87 // pred_region
          %630 = dma.done [#allocation12], 48
        $region112: #{tpu_custom_call.1} parent=87 // pred_fallthru
          _
        %p631 = scmp.lt.s32.totalorder %s42, 3
        %s632 = scalar_select %p631, %s42, 3
        %s633 = smul.addr %s632, 16
        %s634 = smul.addr %s633, 8
        %s635 = scalar_lea.vmem %s0, %s634
        %p636 = pneg %p63
        %p637 = pneg %p60
        %s638 = sand.u32 %s76, 1
        %s639 = scalar_lea.sflag [#allocation3], %s638
        %s640 = sand.u32 %s76, 1
        %s641 = scalar_lea.vmem [#allocation2], %s640
        %p642 = pneg %p89
        %p643 = pneg %p86
        %p644 = scmp.lt.s32.totalorder %s42, 3
        %s645 = scalar_select %p644, %s42, 3
        %s646 = smul.addr %s645, 8
        %s647 = scalar_lea.vmem %s2, %s646
        %p648 = pneg %p115
        %p649 = pneg %p112
        %p650 = pneg %p136
        %p651 = pneg %p133
        %p652 = pneg %p157
        %p653 = pneg %p154
        %p654 = pneg %p178
        %p655 = pneg %p175
        %p656 = pneg %p199
        %p657 = pneg %p196
        %p658 = pneg %p220
        %p659 = pneg %p217
        %p660 = pneg %p241
        %p661 = pneg %p238
        %p662 = pneg %p262
        %p663 = pneg %p259
        %p664 = pneg %p283
        %p665 = pneg %p280
        %p666 = pneg %p304
        %p667 = pneg %p301
        %p668 = pneg %p325
        %p669 = pneg %p322
        %p670 = pneg %p346
        %p671 = pneg %p343
        %p672 = pneg %p367
        %p673 = pneg %p364
        %p674 = pneg %p388
        %p675 = pneg %p385
        %p676 = pneg %p409
        %p677 = pneg %p406
        %p678 = pneg %p435
        %p679 = pneg %p432
        %s680 = sand.u32 %s422, 1
        %s681 = scalar_lea.sflag [#allocation4], %s680
        %s682 = sand.u32 %s422, 1
        %s683 = smul.addr %s682, 8
        %s684 = scalar_lea.vmem [#allocation13], %s683
        %p685 = pneg %p461
        %p686 = pneg %p458
        %s687 = sand.u32 %s448, 1
        %s688 = scalar_lea.sflag [#allocation15], %s687
        %s689 = sand.u32 %s448, 1
        %s690 = smul.addr %s689, 16
        %s691 = scalar_lea.vmem [#allocation14], %s690
        %p692 = scmp.lt.s32.totalorder %s42, 3
        %s693 = scalar_select %p692, %s42, 3
        %s694 = smul.addr %s693, 16
        %s695 = smul.addr %s694, 8
        %s696 = scalar_lea.vmem %s0, %s695
        %p697 = scmp.lt.s32.totalorder %s42, 3
        %s698 = scalar_select %p697, %s42, 3
        %s699 = smul.addr %s698, 8
        %s700 = scalar_lea.vmem %s2, %s699
        %v702 = vld [vmem:[%s696] sm:$0xff]
        %v703 = vld [vmem:[%s696 + $0x8] sm:$0xff]
        %v704 = vld [vmem:[%s696 + $0x10] sm:$0xff]
        %v705 = vld [vmem:[%s696 + $0x18] sm:$0xff]
        %v706 = vld [vmem:[%s696 + $0x20] sm:$0xff]
        %v707 = vld [vmem:[%s696 + $0x28] sm:$0xff]
        %v708 = vld [vmem:[%s696 + $0x30] sm:$0xff]
        %v709 = vld [vmem:[%s696 + $0x38] sm:$0xff]
        %v710 = vld [vmem:[%s696 + $0x40] sm:$0xff]
        %v711 = vld [vmem:[%s696 + $0x48] sm:$0xff]
        %v712 = vld [vmem:[%s696 + $0x50] sm:$0xff]
        %v713 = vld [vmem:[%s696 + $0x58] sm:$0xff]
        %v714 = vld [vmem:[%s696 + $0x60] sm:$0xff]
        %v715 = vld [vmem:[%s696 + $0x68] sm:$0xff]
        %v716 = vld [vmem:[%s696 + $0x70] sm:$0xff]
        %v717 = vld [vmem:[%s696 + $0x78] sm:$0xff]
        %v718 = vlaneseq
        %v719 = vand.u32 %v718, 127
        %720 = vset.pattern.permute.xlu0 0
        %721 = vperm.xlu0 %720, %v702
        %v722 = vpop.permute.xlu0 %721
        %723 = vset.pattern.permute.xlu0 0
        %724 = vperm.xlu0 %723, %v703
        %v725 = vpop.permute.xlu0 %724
        %726 = vset.pattern.permute.xlu0 0
        %727 = vperm.xlu0 %726, %v704
        %v728 = vpop.permute.xlu0 %727
        %729 = vset.pattern.permute.xlu0 0
        %730 = vperm.xlu0 %729, %v705
        %v731 = vpop.permute.xlu0 %730
        %732 = vset.pattern.permute.xlu0 0
        %733 = vperm.xlu0 %732, %v706
        %v734 = vpop.permute.xlu0 %733
        %735 = vset.pattern.permute.xlu0 0
        %736 = vperm.xlu0 %735, %v707
        %v737 = vpop.permute.xlu0 %736
        %738 = vset.pattern.permute.xlu0 0
        %739 = vperm.xlu0 %738, %v708
        %v740 = vpop.permute.xlu0 %739
        %741 = vset.pattern.permute.xlu0 0
        %742 = vperm.xlu0 %741, %v709
        %v743 = vpop.permute.xlu0 %742
        %744 = vset.pattern.permute.xlu0 0
        %745 = vperm.xlu0 %744, %v710
        %v746 = vpop.permute.xlu0 %745
        %747 = vset.pattern.permute.xlu0 0
        %748 = vperm.xlu0 %747, %v711
        %v749 = vpop.permute.xlu0 %748
        %750 = vset.pattern.permute.xlu0 0
        %751 = vperm.xlu0 %750, %v712
        %v752 = vpop.permute.xlu0 %751
        %753 = vset.pattern.permute.xlu0 0
        %754 = vperm.xlu0 %753, %v713
        %v755 = vpop.permute.xlu0 %754
        %756 = vset.pattern.permute.xlu0 0
        %757 = vperm.xlu0 %756, %v714
        %v758 = vpop.permute.xlu0 %757
        %759 = vset.pattern.permute.xlu0 0
        %760 = vperm.xlu0 %759, %v715
        %v761 = vpop.permute.xlu0 %760
        %762 = vset.pattern.permute.xlu0 0
        %763 = vperm.xlu0 %762, %v716
        %v764 = vpop.permute.xlu0 %763
        %765 = vset.pattern.permute.xlu0 0
        %766 = vperm.xlu0 %765, %v717
        %v767 = vpop.permute.xlu0 %766
        %vm768 = vcmp.eq.s32.totalorder %v722, %v719
        %vm769 = vcmp.eq.s32.totalorder %v725, %v719
        %vm770 = vcmp.eq.s32.totalorder %v728, %v719
        %vm771 = vcmp.eq.s32.totalorder %v731, %v719
        %vm772 = vcmp.eq.s32.totalorder %v734, %v719
        %vm773 = vcmp.eq.s32.totalorder %v737, %v719
        %vm774 = vcmp.eq.s32.totalorder %v740, %v719
        %vm775 = vcmp.eq.s32.totalorder %v743, %v719
        %vm776 = vcmp.eq.s32.totalorder %v746, %v719
        %vm777 = vcmp.eq.s32.totalorder %v749, %v719
        %vm778 = vcmp.eq.s32.totalorder %v752, %v719
        %vm779 = vcmp.eq.s32.totalorder %v755, %v719
        %vm780 = vcmp.eq.s32.totalorder %v758, %v719
        %vm781 = vcmp.eq.s32.totalorder %v761, %v719
        %vm782 = vcmp.eq.s32.totalorder %v764, %v719
        %vm783 = vcmp.eq.s32.totalorder %v767, %v719
        %v784 = vsel %vm768, 1, 0
        %v785 = vsel %vm769, 1, 0
        %v786 = vsel %vm770, 1, 0
        %v787 = vsel %vm771, 1, 0
        %v788 = vsel %vm772, 1, 0
        %v789 = vsel %vm773, 1, 0
        %v790 = vsel %vm774, 1, 0
        %v791 = vsel %vm775, 1, 0
        %v792 = vsel %vm776, 1, 0
        %v793 = vsel %vm777, 1, 0
        %v794 = vsel %vm778, 1, 0
        %v795 = vsel %vm779, 1, 0
        %v796 = vsel %vm780, 1, 0
        %v797 = vsel %vm781, 1, 0
        %v798 = vsel %vm782, 1, 0
        %v799 = vsel %vm783, 1, 0
        %v800 = vcvt.s32.f32 %v784
        %v801 = vcvt.s32.f32 %v785
        %v802 = vcvt.s32.f32 %v786
        %v803 = vcvt.s32.f32 %v787
        %v804 = vcvt.s32.f32 %v788
        %v805 = vcvt.s32.f32 %v789
        %v806 = vcvt.s32.f32 %v790
        %v807 = vcvt.s32.f32 %v791
        %v808 = vcvt.s32.f32 %v792
        %v809 = vcvt.s32.f32 %v793
        %v810 = vcvt.s32.f32 %v794
        %v811 = vcvt.s32.f32 %v795
        %v812 = vcvt.s32.f32 %v796
        %v813 = vcvt.s32.f32 %v797
        %v814 = vcvt.s32.f32 %v798
        %v815 = vcvt.s32.f32 %v799
        %v816 = vpack.c.bf16 %v801, %v800
        %v817 = vpack.c.bf16 %v803, %v802
        %v818 = vpack.c.bf16 %v805, %v804
        %v819 = vpack.c.bf16 %v807, %v806
        %v820 = vpack.c.bf16 %v809, %v808
        %v821 = vpack.c.bf16 %v811, %v810
        %v822 = vpack.c.bf16 %v813, %v812
        %v823 = vpack.c.bf16 %v815, %v814
        %v824 = vld [vmem:[#allocation5] sm:$0xf]
        %v825 = vld [vmem:[#allocation5 + $0x4] sm:$0xf]
        %v826 = vld [vmem:[#allocation5 + $0x8] sm:$0xf]
        %v827 = vld [vmem:[#allocation5 + $0xc] sm:$0xf]
        %v828 = vld [vmem:[#allocation5 + $0x10] sm:$0xf]
        %v829 = vld [vmem:[#allocation5 + $0x14] sm:$0xf]
        %v830 = vld [vmem:[#allocation5 + $0x18] sm:$0xf]
        %v831 = vld [vmem:[#allocation5 + $0x1c] sm:$0xf]
        %v840 = vunpack.c.l.b16 %v824
        %v841 = vunpack.c.l.b16 %v825
        %v842 = vunpack.c.l.b16 %v826
        %v843 = vunpack.c.l.b16 %v827
        %v844 = vunpack.c.l.b16 %v828
        %v845 = vunpack.c.l.b16 %v829
        %v846 = vunpack.c.l.b16 %v830
        %v847 = vunpack.c.l.b16 %v831
        %v848 = vpack.c.b16 %v841, %v840
        %v849 = vpack.c.b16 %v843, %v842
        %v850 = vpack.c.b16 %v845, %v844
        %v851 = vpack.c.b16 %v847, %v846
        %vm856 = vcmask 523264
        %v858 = vsel %vm856, %v816, 0
        %v861 = vsel %vm856, %v817, 0
        %v864 = vsel %vm856, %v818, 0
        %v867 = vsel %vm856, %v819, 0
        %v870 = vsel %vm856, %v820, 0
        %v873 = vsel %vm856, %v821, 0
        %v876 = vsel %vm856, %v822, 0
        %v879 = vsel %vm856, %v823, 0
        %881 = vmatprep.subr.bf16.mxu0 0
        %882 = vmatpush1.bf16.msra.mxu0 0
        %883 = vmatprep.subr.bf16.mxu0 0
        %884 = vmatpush1.bf16.msra.mxu0 0
        %885 = vmatprep.subr.bf16.mxu0 0
        %886 = vmatpush1.bf16.msra.mxu0 0
        %887 = vmatprep.subr.bf16.mxu0 0
        %888 = vmatpush1.bf16.msra.mxu0 0
        %889 = vmatprep.subr.bf16.mxu0 0
        %890 = vmatpush1.bf16.msra.mxu0 %v851
        %891 = vmatprep.subr.bf16.mxu0 0
        %892 = vmatpush1.bf16.msra.mxu0 %v850
        %893 = vmatprep.subr.bf16.mxu0 0
        %894 = vmatpush1.bf16.msra.mxu0 %v849
        %895 = vmatprep.subr.bf16.mxu0 0
        %896 = vmatpush1.bf16.msra.mxu0 %v848
        %897 = vmatprep.subr.bf16.mxu0 0
        %898 = vmatpush2.bf16.msra.mxu0 0
        %899 = vmatprep.subr.bf16.mxu0 0
        %900 = vmatpush2.bf16.msra.mxu0 0
        %901 = vmatprep.subr.bf16.mxu0 0
        %902 = vmatpush2.bf16.msra.mxu0 0
        %903 = vmatprep.subr.bf16.mxu0 0
        %904 = vmatpush2.bf16.msra.mxu0 0
        %905 = vmatprep.subr.bf16.mxu0 0
        %906 = vmatpush2.bf16.msra.mxu0 0
        %907 = vmatprep.subr.bf16.mxu0 0
        %908 = vmatpush2.bf16.msra.mxu0 0
        %909 = vmatprep.subr.bf16.mxu0 0
        %910 = vmatpush2.bf16.msra.mxu0 0
        %911 = vmatprep.subr.bf16.mxu0 0
        %912 = vmatpush2.bf16.msra.mxu0 0
        %913 = vmatprep.mubr.bf16.mxu0 0
        %914 = vmatmul.mubr.bf16.gmra.mxu0 %v858
        %v915 = vpop.f32.mrf.mxu0
        %v916 = vadd.f32 0.0, %v915
        %v917 = vpop.f32.mrf.mxu0
        %v918 = vpop.f32.mrf.mxu0
        %v919 = vadd.f32 0.0, %v918
        %v920 = vpop.f32.mrf.mxu0
        %921 = vmatprep.mubr.bf16.mxu0 0
        %922 = vmatmul.mubr.bf16.gmra.mxu0 %v861
        %v923 = vpop.f32.mrf.mxu0
        %v924 = vadd.f32 0.0, %v923
        %v925 = vpop.f32.mrf.mxu0
        %v926 = vpop.f32.mrf.mxu0
        %v927 = vadd.f32 0.0, %v926
        %v928 = vpop.f32.mrf.mxu0
        %929 = vmatprep.mubr.bf16.mxu0 0
        %930 = vmatmul.mubr.bf16.gmra.mxu0 %v864
        %v931 = vpop.f32.mrf.mxu0
        %v932 = vadd.f32 0.0, %v931
        %v933 = vpop.f32.mrf.mxu0
        %v934 = vpop.f32.mrf.mxu0
        %v935 = vadd.f32 0.0, %v934
        %v936 = vpop.f32.mrf.mxu0
        %937 = vmatprep.mubr.bf16.mxu0 0
        %938 = vmatmul.mubr.bf16.gmra.mxu0 %v867
        %v939 = vpop.f32.mrf.mxu0
        %v940 = vadd.f32 0.0, %v939
        %v941 = vpop.f32.mrf.mxu0
        %v942 = vpop.f32.mrf.mxu0
        %v943 = vadd.f32 0.0, %v942
        %v944 = vpop.f32.mrf.mxu0
        %945 = vmatprep.mubr.bf16.mxu0 0
        %946 = vmatmul.mubr.bf16.gmra.mxu0 %v870
        %v947 = vpop.f32.mrf.mxu0
        %v948 = vadd.f32 0.0, %v947
        %v949 = vpop.f32.mrf.mxu0
        %v950 = vpop.f32.mrf.mxu0
        %v951 = vadd.f32 0.0, %v950
        %v952 = vpop.f32.mrf.mxu0
        %953 = vmatprep.mubr.bf16.mxu0 0
        %954 = vmatmul.mubr.bf16.gmra.mxu0 %v873
        %v955 = vpop.f32.mrf.mxu0
        %v956 = vadd.f32 0.0, %v955
        %v957 = vpop.f32.mrf.mxu0
        %v958 = vpop.f32.mrf.mxu0
        %v959 = vadd.f32 0.0, %v958
        %v960 = vpop.f32.mrf.mxu0
        %961 = vmatprep.mubr.bf16.mxu0 0
        %962 = vmatmul.mubr.bf16.gmra.mxu0 %v876
        %v963 = vpop.f32.mrf.mxu0
        %v964 = vadd.f32 0.0, %v963
        %v965 = vpop.f32.mrf.mxu0
        %v966 = vpop.f32.mrf.mxu0
        %v967 = vadd.f32 0.0, %v966
        %v968 = vpop.f32.mrf.mxu0
        %969 = vmatprep.mubr.bf16.mxu0 0
        %970 = vmatmul.mubr.bf16.gmra.mxu0 %v879
        %v971 = vpop.f32.mrf.mxu0
        %v972 = vadd.f32 0.0, %v971
        %v973 = vpop.f32.mrf.mxu0
        %v974 = vpop.f32.mrf.mxu0
        %v975 = vadd.f32 0.0, %v974
        %v976 = vpop.f32.mrf.mxu0
        %977 = vdwg.mxu0
        %v978 = vld [vmem:[%s4] sm:$0xff]
        %v979 = vld [vmem:[%s4 + $0x8] sm:$0xff]
        %v980 = vadd.f32 %v916, %v978
        %v981 = vadd.f32 %v919, %v979
        %v982 = vadd.f32 %v924, %v978
        %v983 = vadd.f32 %v927, %v979
        %v984 = vadd.f32 %v932, %v978
        %v985 = vadd.f32 %v935, %v979
        %v986 = vadd.f32 %v940, %v978
        %v987 = vadd.f32 %v943, %v979
        %v988 = vadd.f32 %v948, %v978
        %v989 = vadd.f32 %v951, %v979
        %v990 = vadd.f32 %v956, %v978
        %v991 = vadd.f32 %v959, %v979
        %v992 = vadd.f32 %v964, %v978
        %v993 = vadd.f32 %v967, %v979
        %v994 = vadd.f32 %v972, %v978
        %v995 = vadd.f32 %v975, %v979
        %996 = vadd.xlane.f32.xlu0 %v980
        %v997 = vpop.xlane.xlu0 %996
        %998 = vadd.xlane.f32.xlu0 %v981
        %v999 = vpop.xlane.xlu0 %998
        %1000 = vadd.xlane.f32.xlu0 %v982
        %v1001 = vpop.xlane.xlu0 %1000
        %1002 = vadd.xlane.f32.xlu0 %v983
        %v1003 = vpop.xlane.xlu0 %1002
        %1004 = vadd.xlane.f32.xlu0 %v984
        %v1005 = vpop.xlane.xlu0 %1004
        %1006 = vadd.xlane.f32.xlu0 %v985
        %v1007 = vpop.xlane.xlu0 %1006
        %1008 = vadd.xlane.f32.xlu0 %v986
        %v1009 = vpop.xlane.xlu0 %1008
        %1010 = vadd.xlane.f32.xlu0 %v987
        %v1011 = vpop.xlane.xlu0 %1010
        %1012 = vadd.xlane.f32.xlu0 %v988
        %v1013 = vpop.xlane.xlu0 %1012
        %1014 = vadd.xlane.f32.xlu0 %v989
        %v1015 = vpop.xlane.xlu0 %1014
        %1016 = vadd.xlane.f32.xlu0 %v990
        %v1017 = vpop.xlane.xlu0 %1016
        %1018 = vadd.xlane.f32.xlu0 %v991
        %v1019 = vpop.xlane.xlu0 %1018
        %1020 = vadd.xlane.f32.xlu0 %v992
        %v1021 = vpop.xlane.xlu0 %1020
        %1022 = vadd.xlane.f32.xlu0 %v993
        %v1023 = vpop.xlane.xlu0 %1022
        %1024 = vadd.xlane.f32.xlu0 %v994
        %v1025 = vpop.xlane.xlu0 %1024
        %1026 = vadd.xlane.f32.xlu0 %v995
        %v1027 = vpop.xlane.xlu0 %1026
        %v1028 = vrcp.pop 128.0
        %v1029 = vmul.f32 %v997, %v1028
        %v1030 = vmul.f32 %v999, %v1028
        %v1031 = vmul.f32 %v1001, %v1028
        %v1032 = vmul.f32 %v1003, %v1028
        %v1033 = vmul.f32 %v1005, %v1028
        %v1034 = vmul.f32 %v1007, %v1028
        %v1035 = vmul.f32 %v1009, %v1028
        %v1036 = vmul.f32 %v1011, %v1028
        %v1037 = vmul.f32 %v1013, %v1028
        %v1038 = vmul.f32 %v1015, %v1028
        %v1039 = vmul.f32 %v1017, %v1028
        %v1040 = vmul.f32 %v1019, %v1028
        %v1041 = vmul.f32 %v1021, %v1028
        %v1042 = vmul.f32 %v1023, %v1028
        %v1043 = vmul.f32 %v1025, %v1028
        %v1044 = vmul.f32 %v1027, %v1028
        %v1045 = vsub.f32 %v980, %v1029
        %v1046 = vsub.f32 %v981, %v1030
        %v1047 = vsub.f32 %v982, %v1031
        %v1048 = vsub.f32 %v983, %v1032
        %v1049 = vsub.f32 %v984, %v1033
        %v1050 = vsub.f32 %v985, %v1034
        %v1051 = vsub.f32 %v986, %v1035
        %v1052 = vsub.f32 %v987, %v1036
        %v1053 = vsub.f32 %v988, %v1037
        %v1054 = vsub.f32 %v989, %v1038
        %v1055 = vsub.f32 %v990, %v1039
        %v1056 = vsub.f32 %v991, %v1040
        %v1057 = vsub.f32 %v992, %v1041
        %v1058 = vsub.f32 %v993, %v1042
        %v1059 = vsub.f32 %v994, %v1043
        %v1060 = vsub.f32 %v995, %v1044
        %v1061 = vmul.f32 %v1045, %v1045
        %v1062 = vmul.f32 %v1046, %v1046
        %v1063 = vmul.f32 %v1047, %v1047
        %v1064 = vmul.f32 %v1048, %v1048
        %v1065 = vmul.f32 %v1049, %v1049
        %v1066 = vmul.f32 %v1050, %v1050
        %v1067 = vmul.f32 %v1051, %v1051
        %v1068 = vmul.f32 %v1052, %v1052
        %v1069 = vmul.f32 %v1053, %v1053
        %v1070 = vmul.f32 %v1054, %v1054
        %v1071 = vmul.f32 %v1055, %v1055
        %v1072 = vmul.f32 %v1056, %v1056
        %v1073 = vmul.f32 %v1057, %v1057
        %v1074 = vmul.f32 %v1058, %v1058
        %v1075 = vmul.f32 %v1059, %v1059
        %v1076 = vmul.f32 %v1060, %v1060
        %1077 = vadd.xlane.f32.xlu0 %v1061
        %v1078 = vpop.xlane.xlu0 %1077
        %1079 = vadd.xlane.f32.xlu0 %v1062
        %v1080 = vpop.xlane.xlu0 %1079
        %1081 = vadd.xlane.f32.xlu0 %v1063
        %v1082 = vpop.xlane.xlu0 %1081
        %1083 = vadd.xlane.f32.xlu0 %v1064
        %v1084 = vpop.xlane.xlu0 %1083
        %1085 = vadd.xlane.f32.xlu0 %v1065
        %v1086 = vpop.xlane.xlu0 %1085
        %1087 = vadd.xlane.f32.xlu0 %v1066
        %v1088 = vpop.xlane.xlu0 %1087
        %1089 = vadd.xlane.f32.xlu0 %v1067
        %v1090 = vpop.xlane.xlu0 %1089
        %1091 = vadd.xlane.f32.xlu0 %v1068
        %v1092 = vpop.xlane.xlu0 %1091
        %1093 = vadd.xlane.f32.xlu0 %v1069
        %v1094 = vpop.xlane.xlu0 %1093
        %1095 = vadd.xlane.f32.xlu0 %v1070
        %v1096 = vpop.xlane.xlu0 %1095
        %1097 = vadd.xlane.f32.xlu0 %v1071
        %v1098 = vpop.xlane.xlu0 %1097
        %1099 = vadd.xlane.f32.xlu0 %v1072
        %v1100 = vpop.xlane.xlu0 %1099
        %1101 = vadd.xlane.f32.xlu0 %v1073
        %v1102 = vpop.xlane.xlu0 %1101
        %1103 = vadd.xlane.f32.xlu0 %v1074
        %v1104 = vpop.xlane.xlu0 %1103
        %1105 = vadd.xlane.f32.xlu0 %v1075
        %v1106 = vpop.xlane.xlu0 %1105
        %1107 = vadd.xlane.f32.xlu0 %v1076
        %v1108 = vpop.xlane.xlu0 %1107
        %v1109 = vmul.f32 %v1078, %v1028
        %v1110 = vmul.f32 %v1080, %v1028
        %v1111 = vmul.f32 %v1082, %v1028
        %v1112 = vmul.f32 %v1084, %v1028
        %v1113 = vmul.f32 %v1086, %v1028
        %v1114 = vmul.f32 %v1088, %v1028
        %v1115 = vmul.f32 %v1090, %v1028
        %v1116 = vmul.f32 %v1092, %v1028
        %v1117 = vmul.f32 %v1094, %v1028
        %v1118 = vmul.f32 %v1096, %v1028
        %v1119 = vmul.f32 %v1098, %v1028
        %v1120 = vmul.f32 %v1100, %v1028
        %v1121 = vmul.f32 %v1102, %v1028
        %v1122 = vmul.f32 %v1104, %v1028
        %v1123 = vmul.f32 %v1106, %v1028
        %v1124 = vmul.f32 %v1108, %v1028
        %v1125 = vadd.f32 %v1109, 1e-05
        %v1126 = vadd.f32 %v1110, 1e-05
        %v1127 = vadd.f32 %v1111, 1e-05
        %v1128 = vadd.f32 %v1112, 1e-05
        %v1129 = vadd.f32 %v1113, 1e-05
        %v1130 = vadd.f32 %v1114, 1e-05
        %v1131 = vadd.f32 %v1115, 1e-05
        %v1132 = vadd.f32 %v1116, 1e-05
        %v1133 = vadd.f32 %v1117, 1e-05
        %v1134 = vadd.f32 %v1118, 1e-05
        %v1135 = vadd.f32 %v1119, 1e-05
        %v1136 = vadd.f32 %v1120, 1e-05
        %v1137 = vadd.f32 %v1121, 1e-05
        %v1138 = vadd.f32 %v1122, 1e-05
        %v1139 = vadd.f32 %v1123, 1e-05
        %v1140 = vadd.f32 %v1124, 1e-05
        %v1141 = vrsqrt.pop %v1125
        %v1142 = vrsqrt.pop %v1126
        %v1143 = vrsqrt.pop %v1127
        %v1144 = vrsqrt.pop %v1128
        %v1145 = vrsqrt.pop %v1129
        %v1146 = vrsqrt.pop %v1130
        %v1147 = vrsqrt.pop %v1131
        %v1148 = vrsqrt.pop %v1132
        %v1149 = vrsqrt.pop %v1133
        %v1150 = vrsqrt.pop %v1134
        %v1151 = vrsqrt.pop %v1135
        %v1152 = vrsqrt.pop %v1136
        %v1153 = vrsqrt.pop %v1137
        %v1154 = vrsqrt.pop %v1138
        %v1155 = vrsqrt.pop %v1139
        %v1156 = vrsqrt.pop %v1140
        %v1157 = vmul.f32 %v1045, %v1141
        %v1158 = vmul.f32 %v1046, %v1142
        %v1159 = vmul.f32 %v1047, %v1143
        %v1160 = vmul.f32 %v1048, %v1144
        %v1161 = vmul.f32 %v1049, %v1145
        %v1162 = vmul.f32 %v1050, %v1146
        %v1163 = vmul.f32 %v1051, %v1147
        %v1164 = vmul.f32 %v1052, %v1148
        %v1165 = vmul.f32 %v1053, %v1149
        %v1166 = vmul.f32 %v1054, %v1150
        %v1167 = vmul.f32 %v1055, %v1151
        %v1168 = vmul.f32 %v1056, %v1152
        %v1169 = vmul.f32 %v1057, %v1153
        %v1170 = vmul.f32 %v1058, %v1154
        %v1171 = vmul.f32 %v1059, %v1155
        %v1172 = vmul.f32 %v1060, %v1156
        %v1173 = vld [vmem:[#allocation7] sm:$0xff]
        %v1174 = vld [vmem:[%s606] sm:$0x1]
        %v1176 = vlaneseq
        %v1177 = vshrl.u32 %v1176, 7
        %v1178 = vsub.s32 0, %v1177
        %v1179 = vrot.slane %v1174, %v1178
        %v1181 = vmul.f32 %v1173, %v1179
        %1182 = vmatprep.subr.mxu0 0.0
        %1183 = vmatpush1.msra.mxu0 %v1172
        %1184 = vmatprep.subr.mxu0 0.0
        %1185 = vmatpush1.msra.mxu0 %v1171
        %1186 = vmatprep.subr.mxu0 0.0
        %1187 = vmatpush1.msra.mxu0 %v1170
        %1188 = vmatprep.subr.mxu0 0.0
        %1189 = vmatpush1.msra.mxu0 %v1169
        %1190 = vmatprep.subr.mxu0 0.0
        %1191 = vmatpush1.msra.mxu0 %v1168
        %1192 = vmatprep.subr.mxu0 0.0
        %1193 = vmatpush1.msra.mxu0 %v1167
        %1194 = vmatprep.subr.mxu0 0.0
        %1195 = vmatpush1.msra.mxu0 %v1166
        %1196 = vmatprep.subr.mxu0 0.0
        %1197 = vmatpush1.msra.mxu0 %v1165
        %1198 = vmatprep.subr.mxu0 0.0
        %1199 = vmatpush1.msra.mxu0 %v1164
        %1200 = vmatprep.subr.mxu0 0.0
        %1201 = vmatpush1.msra.mxu0 %v1163
        %1202 = vmatprep.subr.mxu0 0.0
        %1203 = vmatpush1.msra.mxu0 %v1162
        %1204 = vmatprep.subr.mxu0 0.0
        %1205 = vmatpush1.msra.mxu0 %v1161
        %1206 = vmatprep.subr.mxu0 0.0
        %1207 = vmatpush1.msra.mxu0 %v1160
        %1208 = vmatprep.subr.mxu0 0.0
        %1209 = vmatpush1.msra.mxu0 %v1159
        %1210 = vmatprep.subr.mxu0 0.0
        %1211 = vmatpush1.msra.mxu0 %v1158
        %1212 = vmatprep.subr.mxu0 0.0
        %1213 = vmatpush1.msra.mxu0 %v1157
        %1214 = vmatprep.subr.mxu0 0.0
        %1215 = vmatpush2.msra.mxu0 0.0
        %1216 = vmatprep.subr.mxu0 0.0
        %1217 = vmatpush2.msra.mxu0 0.0
        %1218 = vmatprep.subr.mxu0 0.0
        %1219 = vmatpush2.msra.mxu0 0.0
        %1220 = vmatprep.subr.mxu0 0.0
        %1221 = vmatpush2.msra.mxu0 0.0
        %1222 = vmatprep.subr.mxu0 0.0
        %1223 = vmatpush2.msra.mxu0 0.0
        %1224 = vmatprep.subr.mxu0 0.0
        %1225 = vmatpush2.msra.mxu0 0.0
        %1226 = vmatprep.subr.mxu0 0.0
        %1227 = vmatpush2.msra.mxu0 0.0
        %1228 = vmatprep.subr.mxu0 0.0
        %1229 = vmatpush2.msra.mxu0 0.0
        %1230 = vmatprep.subr.mxu0 0.0
        %1231 = vmatpush2.msra.mxu0 0.0
        %1232 = vmatprep.subr.mxu0 0.0
        %1233 = vmatpush2.msra.mxu0 0.0
        %1234 = vmatprep.subr.mxu0 0.0
        %1235 = vmatpush2.msra.mxu0 0.0
        %1236 = vmatprep.subr.mxu0 0.0
        %1237 = vmatpush2.msra.mxu0 0.0
        %1238 = vmatprep.subr.mxu0 0.0
        %1239 = vmatpush2.msra.mxu0 0.0
        %1240 = vmatprep.subr.mxu0 0.0
        %1241 = vmatpush2.msra.mxu0 0.0
        %1242 = vmatprep.subr.mxu0 0.0
        %1243 = vmatpush2.msra.mxu0 0.0
        %1244 = vmatprep.subr.mxu0 0.0
        %1245 = vmatpush2.msra.mxu0 0.0
        %1246 = vmatprep.mubr.f32.mxu0 0.0
        %1247 = vmatmul.mubr.f32.gmra.mxu0 %v1181
        %v1248 = vpop.f32.mrf.mxu0
        %v1249 = vadd.f32 0.0, %v1248
        %v1250 = vpop.f32.mrf.mxu0
        %1251 = vdwg.mxu0
        %1252 = vadd.xlane.f32.xlu0 %v1181
        %v1253 = vpop.xlane.xlu0 %1252
        %v1254 = vmax.f32 %v1253, 1e-09
        %v1255 = vrcp.pop %v1254
        %v1256 = vmul.f32 %v1249, %v1255
        %v1257 = vld [vmem:[%s7] sm:$0xff]
        %v1258 = vld [vmem:[%s7 + $0x8] sm:$0xff]
        %v1259 = vld [vmem:[%s7 + $0x10] sm:$0xff]
        %v1260 = vld [vmem:[%s7 + $0x18] sm:$0xff]
        %vm1261 = vcmask 64512
        %v1263 = vsel %vm1261, %v1257, 0
        %v1266 = vsel %vm1261, %v1258, 0
        %v1269 = vsel %vm1261, %v1259, 0
        %v1272 = vsel %vm1261, %v1260, 0
        %1274 = vmatprep.subr.mxu0 0.0
        %1275 = vmatpush1.msra.mxu0 0.0
        %1276 = vmatprep.subr.mxu0 0.0
        %1277 = vmatpush1.msra.mxu0 0.0
        %1278 = vmatprep.subr.mxu0 0.0
        %1279 = vmatpush1.msra.mxu0 0.0
        %1280 = vmatprep.subr.mxu0 0.0
        %1281 = vmatpush1.msra.mxu0 0.0
        %1282 = vmatprep.subr.mxu0 0.0
        %1283 = vmatpush1.msra.mxu0 0.0
        %1284 = vmatprep.subr.mxu0 0.0
        %1285 = vmatpush1.msra.mxu0 0.0
        %1286 = vmatprep.subr.mxu0 0.0
        %1287 = vmatpush1.msra.mxu0 0.0
        %1288 = vmatprep.subr.mxu0 0.0
        %1289 = vmatpush1.msra.mxu0 0.0
        %1290 = vmatprep.subr.mxu0 0.0
        %1291 = vmatpush1.msra.mxu0 0.0
        %1292 = vmatprep.subr.mxu0 0.0
        %1293 = vmatpush1.msra.mxu0 0.0
        %1294 = vmatprep.subr.mxu0 0.0
        %1295 = vmatpush1.msra.mxu0 0.0
        %1296 = vmatprep.subr.mxu0 0.0
        %1297 = vmatpush1.msra.mxu0 0.0
        %1298 = vmatprep.subr.mxu0 0.0
        %1299 = vmatpush1.msra.mxu0 0.0
        %1300 = vmatprep.subr.mxu0 0.0
        %1301 = vmatpush1.msra.mxu0 0.0
        %1302 = vmatprep.subr.mxu0 0.0
        %1303 = vmatpush1.msra.mxu0 0.0
        %1304 = vmatprep.subr.mxu0 0.0
        %1305 = vmatpush1.msra.mxu0 %v1256
        %1306 = vmatprep.subr.mxu0 0.0
        %1307 = vmatpush2.msra.mxu0 0.0
        %1308 = vmatprep.subr.mxu0 0.0
        %1309 = vmatpush2.msra.mxu0 0.0
        %1310 = vmatprep.subr.mxu0 0.0
        %1311 = vmatpush2.msra.mxu0 0.0
        %1312 = vmatprep.subr.mxu0 0.0
        %1313 = vmatpush2.msra.mxu0 0.0
        %1314 = vmatprep.subr.mxu0 0.0
        %1315 = vmatpush2.msra.mxu0 0.0
        %1316 = vmatprep.subr.mxu0 0.0
        %1317 = vmatpush2.msra.mxu0 0.0
        %1318 = vmatprep.subr.mxu0 0.0
        %1319 = vmatpush2.msra.mxu0 0.0
        %1320 = vmatprep.subr.mxu0 0.0
        %1321 = vmatpush2.msra.mxu0 0.0
        %1322 = vmatprep.subr.mxu0 0.0
        %1323 = vmatpush2.msra.mxu0 0.0
        %1324 = vmatprep.subr.mxu0 0.0
        %1325 = vmatpush2.msra.mxu0 0.0
        %1326 = vmatprep.subr.mxu0 0.0
        %1327 = vmatpush2.msra.mxu0 0.0
        %1328 = vmatprep.subr.mxu0 0.0
        %1329 = vmatpush2.msra.mxu0 0.0
        %1330 = vmatprep.subr.mxu0 0.0
        %1331 = vmatpush2.msra.mxu0 0.0
        %1332 = vmatprep.subr.mxu0 0.0
        %1333 = vmatpush2.msra.mxu0 0.0
        %1334 = vmatprep.subr.mxu0 0.0
        %1335 = vmatpush2.msra.mxu0 0.0
        %1336 = vmatprep.subr.mxu0 0.0
        %1337 = vmatpush2.msra.mxu0 0.0
        %1338 = vmatprep.mubr.f32.mxu0 0.0
        %1339 = vmatmul.mubr.f32.gmra.mxu0 %v1263
        %v1340 = vpop.f32.mrf.mxu0
        %v1341 = vadd.f32 0.0, %v1340
        %v1342 = vpop.f32.mrf.mxu0
        %1343 = vmatprep.mubr.f32.mxu0 0.0
        %1344 = vmatmul.mubr.f32.gmra.mxu0 %v1266
        %v1345 = vpop.f32.mrf.mxu0
        %v1346 = vadd.f32 0.0, %v1345
        %v1347 = vpop.f32.mrf.mxu0
        %1348 = vmatprep.mubr.f32.mxu0 0.0
        %1349 = vmatmul.mubr.f32.gmra.mxu0 %v1269
        %v1350 = vpop.f32.mrf.mxu0
        %v1351 = vadd.f32 0.0, %v1350
        %v1352 = vpop.f32.mrf.mxu0
        %1353 = vmatprep.mubr.f32.mxu0 0.0
        %1354 = vmatmul.mubr.f32.gmra.mxu0 %v1272
        %v1355 = vpop.f32.mrf.mxu0
        %v1356 = vadd.f32 0.0, %v1355
        %v1357 = vpop.f32.mrf.mxu0
        %1358 = vdwg.mxu0
        %v1359 = vsel %vm1261, %v1259, 0.0
        %1360 = vadd.xlane.f32.xlu0 %v1359
        %v1361 = vpop.xlane.xlu0 %1360
        %v1362 = vsel %vm1261, %v1260, 0.0
        %1363 = vadd.xlane.f32.xlu0 %v1362
        %v1364 = vpop.xlane.xlu0 %1363
        %v1365 = vpack.c.bf16 %v1346, %v1341
        %v1366 = vpack.c.bf16 %v1356, %v1351
        %v1367 = vld [vmem:[%s9] sm:$0xff]
        %v1368 = vld [vmem:[%s9 + $0x8] sm:$0xf]
        %v1369 = vld [vmem:[%s9 + $0xc] sm:$0xff]
        %v1370 = vld [vmem:[%s9 + $0x14] sm:$0xf]
        %v1371 = vld [vmem:[%s9 + $0x18] sm:$0xff]
        %v1372 = vld [vmem:[%s9 + $0x20] sm:$0xf]
        %v1373 = vld [vmem:[%s9 + $0x24] sm:$0xff]
        %v1374 = vld [vmem:[%s9 + $0x2c] sm:$0xf]
        %v1375 = vld [vmem:[%s9 + $0x30] sm:$0xff]
        %v1376 = vld [vmem:[%s9 + $0x38] sm:$0xf]
        %v1377 = vld [vmem:[%s9 + $0x3c] sm:$0xff]
        %v1378 = vld [vmem:[%s9 + $0x44] sm:$0xf]
        %v1379 = vld [vmem:[%s9 + $0x48] sm:$0xff]
        %v1380 = vld [vmem:[%s9 + $0x50] sm:$0xf]
        %v1381 = vld [vmem:[%s9 + $0x54] sm:$0xff]
        %v1382 = vld [vmem:[%s9 + $0x5c] sm:$0xf]
        %v1383 = vld [vmem:[%s9 + $0x60] sm:$0xff]
        %v1384 = vld [vmem:[%s9 + $0x68] sm:$0xf]
        %v1385 = vld [vmem:[%s9 + $0x6c] sm:$0xff]
        %v1386 = vld [vmem:[%s9 + $0x74] sm:$0xf]
        %v1387 = vld [vmem:[%s9 + $0x78] sm:$0xff]
        %v1388 = vld [vmem:[%s9 + $0x80] sm:$0xf]
        %v1389 = vld [vmem:[%s9 + $0x84] sm:$0xff]
        %v1390 = vld [vmem:[%s9 + $0x8c] sm:$0xf]
        %v1391 = vld [vmem:[%s9 + $0x90] sm:$0xff]
        %v1392 = vld [vmem:[%s9 + $0x98] sm:$0xf]
        %v1393 = vld [vmem:[%s9 + $0x9c] sm:$0xff]
        %v1394 = vld [vmem:[%s9 + $0xa4] sm:$0xf]
        %v1395 = vld [vmem:[%s9 + $0xa8] sm:$0xff]
        %v1396 = vld [vmem:[%s9 + $0xb0] sm:$0xf]
        %v1397 = vld [vmem:[%s9 + $0xb4] sm:$0xff]
        %v1398 = vld [vmem:[%s9 + $0xbc] sm:$0xf]
        %v1399 = vld [vmem:[#allocation11] sm:$0x7]
        %v1401 = vlaneseq
        %v1402 = vshrl.u32 %v1401, 7
        %v1403 = vsub.s32 0, %v1402
        %v1404 = vrot.slane %v1399, %v1403
        %v1405 = vlaneseq
        %v1406 = vshrl.u32 %v1405, 7
        %v1407 = vsub.s32 1, %v1406
        %v1408 = vrot.slane %v1399, %v1407
        %v1409 = vlaneseq
        %v1410 = vshrl.u32 %v1409, 7
        %v1411 = vsub.s32 2, %v1410
        %v1412 = vrot.slane %v1399, %v1411
        %v1448 = vunpack.c.l.b16 %v1367
        %v1449 = vunpack.c.h.b16 %v1367
        %v1450 = vunpack.c.l.b16 %v1368
        %v1451 = vunpack.c.l.b16 %v1369
        %v1452 = vunpack.c.h.b16 %v1369
        %v1453 = vunpack.c.l.b16 %v1370
        %v1454 = vunpack.c.l.b16 %v1371
        %v1455 = vunpack.c.h.b16 %v1371
        %v1456 = vunpack.c.l.b16 %v1372
        %v1457 = vunpack.c.l.b16 %v1373
        %v1458 = vunpack.c.h.b16 %v1373
        %v1459 = vunpack.c.l.b16 %v1374
        %v1460 = vunpack.c.l.b16 %v1375
        %v1461 = vunpack.c.h.b16 %v1375
        %v1462 = vunpack.c.l.b16 %v1376
        %v1463 = vunpack.c.l.b16 %v1377
        %v1464 = vunpack.c.h.b16 %v1377
        %v1465 = vunpack.c.l.b16 %v1378
        %v1466 = vunpack.c.l.b16 %v1379
        %v1467 = vunpack.c.h.b16 %v1379
        %v1468 = vunpack.c.l.b16 %v1380
        %v1469 = vunpack.c.l.b16 %v1381
        %v1470 = vunpack.c.h.b16 %v1381
        %v1471 = vunpack.c.l.b16 %v1382
        %v1472 = vunpack.c.l.b16 %v1383
        %v1473 = vunpack.c.h.b16 %v1383
        %v1474 = vunpack.c.l.b16 %v1384
        %v1475 = vunpack.c.l.b16 %v1385
        %v1476 = vunpack.c.h.b16 %v1385
        %v1477 = vunpack.c.l.b16 %v1386
        %v1478 = vunpack.c.l.b16 %v1387
        %v1479 = vunpack.c.h.b16 %v1387
        %v1480 = vunpack.c.l.b16 %v1388
        %v1481 = vunpack.c.l.b16 %v1389
        %v1482 = vunpack.c.h.b16 %v1389
        %v1483 = vunpack.c.l.b16 %v1390
        %v1484 = vunpack.c.l.b16 %v1391
        %v1485 = vunpack.c.h.b16 %v1391
        %v1486 = vunpack.c.l.b16 %v1392
        %v1487 = vunpack.c.l.b16 %v1393
        %v1488 = vunpack.c.h.b16 %v1393
        %v1489 = vunpack.c.l.b16 %v1394
        %v1490 = vunpack.c.l.b16 %v1395
        %v1491 = vunpack.c.h.b16 %v1395
        %v1492 = vunpack.c.l.b16 %v1396
        %v1493 = vunpack.c.l.b16 %v1397
        %v1494 = vunpack.c.h.b16 %v1397
        %v1495 = vunpack.c.l.b16 %v1398
        %v1496 = vpack.c.b16 %v1451, %v1448
        %v1497 = vpack.c.b16 %v1452, %v1449
        %v1498 = vpack.c.b16 %v1453, %v1450
        %v1499 = vpack.c.b16 %v1457, %v1454
        %v1500 = vpack.c.b16 %v1458, %v1455
        %v1501 = vpack.c.b16 %v1459, %v1456
        %v1502 = vpack.c.b16 %v1463, %v1460
        %v1503 = vpack.c.b16 %v1464, %v1461
        %v1504 = vpack.c.b16 %v1465, %v1462
        %v1505 = vpack.c.b16 %v1469, %v1466
        %v1506 = vpack.c.b16 %v1470, %v1467
        %v1507 = vpack.c.b16 %v1471, %v1468
        %v1508 = vpack.c.b16 %v1475, %v1472
        %v1509 = vpack.c.b16 %v1476, %v1473
        %v1510 = vpack.c.b16 %v1477, %v1474
        %v1511 = vpack.c.b16 %v1481, %v1478
        %v1512 = vpack.c.b16 %v1482, %v1479
        %v1513 = vpack.c.b16 %v1483, %v1480
        %v1514 = vpack.c.b16 %v1487, %v1484
        %v1515 = vpack.c.b16 %v1488, %v1485
        %v1516 = vpack.c.b16 %v1489, %v1486
        %v1517 = vpack.c.b16 %v1493, %v1490
        %v1518 = vpack.c.b16 %v1494, %v1491
        %v1519 = vpack.c.b16 %v1495, %v1492
        %1544 = vmatprep.subr.bf16.mxu0 %v1518
        %1545 = vmatpush1.bf16.msra.mxu0 %v1517
        %1546 = vmatprep.subr.bf16.mxu0 %v1515
        %1547 = vmatpush1.bf16.msra.mxu0 %v1514
        %1548 = vmatprep.subr.bf16.mxu0 %v1512
        %1549 = vmatpush1.bf16.msra.mxu0 %v1511
        %1550 = vmatprep.subr.bf16.mxu0 %v1509
        %1551 = vmatpush1.bf16.msra.mxu0 %v1508
        %1552 = vmatprep.subr.bf16.mxu0 %v1506
        %1553 = vmatpush1.bf16.msra.mxu0 %v1505
        %1554 = vmatprep.subr.bf16.mxu0 %v1503
        %1555 = vmatpush1.bf16.msra.mxu0 %v1502
        %1556 = vmatprep.subr.bf16.mxu0 %v1500
        %1557 = vmatpush1.bf16.msra.mxu0 %v1499
        %1558 = vmatprep.subr.bf16.mxu0 %v1497
        %1559 = vmatpush1.bf16.msra.mxu0 %v1496
        %1560 = vmatprep.subr.bf16.mxu0 0
        %1561 = vmatpush2.bf16.msra.mxu0 0
        %1562 = vmatprep.subr.bf16.mxu0 0
        %1563 = vmatpush2.bf16.msra.mxu0 0
        %1564 = vmatprep.subr.bf16.mxu0 0
        %1565 = vmatpush2.bf16.msra.mxu0 0
        %1566 = vmatprep.subr.bf16.mxu0 0
        %1567 = vmatpush2.bf16.msra.mxu0 0
        %1568 = vmatprep.subr.bf16.mxu0 0
        %1569 = vmatpush2.bf16.msra.mxu0 0
        %1570 = vmatprep.subr.bf16.mxu0 0
        %1571 = vmatpush2.bf16.msra.mxu0 0
        %1572 = vmatprep.subr.bf16.mxu0 0
        %1573 = vmatpush2.bf16.msra.mxu0 0
        %1574 = vmatprep.subr.bf16.mxu0 0
        %1575 = vmatpush2.bf16.msra.mxu0 0
        %1576 = vmatprep.mubr.bf16.mxu0 0
        %1577 = vmatmul.mubr.bf16.gmra.mxu0 %v1365
        %v1578 = vpop.f32.mrf.mxu0
        %v1579 = vadd.f32 %v1404, %v1578
        %v1580 = vpop.f32.mrf.mxu0
        %v1581 = vpop.f32.mrf.mxu0
        %v1582 = vadd.f32 %v1404, %v1581
        %v1583 = vpop.f32.mrf.mxu0
        %1584 = vmatprep.mubr.bf16.mxu0 0
        %1585 = vmatmul.mubr.bf16.gmra.mxu0 %v1366
        %v1586 = vpop.f32.mrf.mxu0
        %v1587 = vpop.f32.mrf.mxu0
        %v1588 = vadd.f32 %v1408, %v1587
        %v1589 = vpop.f32.mrf.mxu0
        %v1590 = vpop.f32.mrf.mxu0
        %v1591 = vadd.f32 %v1408, %v1590
        %1592 = vdwg.mxu0
        %1593 = vmatprep.subr.bf16.mxu0 0
        %1594 = vmatpush1.bf16.msra.mxu0 %v1519
        %1595 = vmatprep.subr.bf16.mxu0 0
        %1596 = vmatpush1.bf16.msra.mxu0 %v1516
        %1597 = vmatprep.subr.bf16.mxu0 0
        %1598 = vmatpush1.bf16.msra.mxu0 %v1513
        %1599 = vmatprep.subr.bf16.mxu0 0
        %1600 = vmatpush1.bf16.msra.mxu0 %v1510
        %1601 = vmatprep.subr.bf16.mxu0 0
        %1602 = vmatpush1.bf16.msra.mxu0 %v1507
        %1603 = vmatprep.subr.bf16.mxu0 0
        %1604 = vmatpush1.bf16.msra.mxu0 %v1504
        %1605 = vmatprep.subr.bf16.mxu0 0
        %1606 = vmatpush1.bf16.msra.mxu0 %v1501
        %1607 = vmatprep.subr.bf16.mxu0 0
        %1608 = vmatpush1.bf16.msra.mxu0 %v1498
        %1609 = vmatprep.subr.bf16.mxu0 0
        %1610 = vmatpush2.bf16.msra.mxu0 0
        %1611 = vmatprep.subr.bf16.mxu0 0
        %1612 = vmatpush2.bf16.msra.mxu0 0
        %1613 = vmatprep.subr.bf16.mxu0 0
        %1614 = vmatpush2.bf16.msra.mxu0 0
        %1615 = vmatprep.subr.bf16.mxu0 0
        %1616 = vmatpush2.bf16.msra.mxu0 0
        %1617 = vmatprep.subr.bf16.mxu0 0
        %1618 = vmatpush2.bf16.msra.mxu0 0
        %1619 = vmatprep.subr.bf16.mxu0 0
        %1620 = vmatpush2.bf16.msra.mxu0 0
        %1621 = vmatprep.subr.bf16.mxu0 0
        %1622 = vmatpush2.bf16.msra.mxu0 0
        %1623 = vmatprep.subr.bf16.mxu0 0
        %1624 = vmatpush2.bf16.msra.mxu0 0
        %1625 = vmatprep.mubr.bf16.mxu0 0
        %1626 = vmatmul.mubr.bf16.gmra.mxu0 %v1365
        %v1627 = vpop.f32.mrf.mxu0
        %v1628 = vpop.f32.mrf.mxu0
        %v1629 = vpop.f32.mrf.mxu0
        %v1630 = vpop.f32.mrf.mxu0
        %1631 = vmatprep.mubr.bf16.mxu0 0
        %1632 = vmatmul.mubr.bf16.gmra.mxu0 %v1366
        %v1633 = vpop.f32.mrf.mxu0
        %v1634 = vadd.f32 %v1412, %v1633
        %v1635 = vpop.f32.mrf.mxu0
        %v1636 = vpop.f32.mrf.mxu0
        %v1637 = vadd.f32 %v1412, %v1636
        %v1638 = vpop.f32.mrf.mxu0
        %1639 = vdwg.mxu0
        %v1640 = vld [vmem:[#allocation8] sm:$0xff]
        %v1641 = vmul.f32 %v1579, %v1588
        %v1642 = vmul.f32 %v1582, %v1591
        %1643 = vmatprep.subr.mxu0 0.0
        %1644 = vmatpush1.xpose.msra.mxu0 0.0
        %1645 = vmatprep.subr.mxu0 0.0
        %1646 = vmatpush1.xpose.msra.mxu0 0.0
        %1647 = vmatprep.subr.mxu0 0.0
        %1648 = vmatpush1.xpose.msra.mxu0 0.0
        %1649 = vmatprep.subr.mxu0 0.0
        %1650 = vmatpush1.xpose.msra.mxu0 0.0
        %1651 = vmatprep.subr.mxu0 0.0
        %1652 = vmatpush1.xpose.msra.mxu0 0.0
        %1653 = vmatprep.subr.mxu0 0.0
        %1654 = vmatpush1.xpose.msra.mxu0 0.0
        %1655 = vmatprep.subr.mxu0 0.0
        %1656 = vmatpush1.xpose.msra.mxu0 0.0
        %1657 = vmatprep.subr.mxu0 0.0
        %1658 = vmatpush1.xpose.msra.mxu0 0.0
        %1659 = vmatprep.subr.mxu0 0.0
        %1660 = vmatpush1.xpose.msra.mxu0 0.0
        %1661 = vmatprep.subr.mxu0 0.0
        %1662 = vmatpush1.xpose.msra.mxu0 0.0
        %1663 = vmatprep.subr.mxu0 0.0
        %1664 = vmatpush1.xpose.msra.mxu0 0.0
        %1665 = vmatprep.subr.mxu0 0.0
        %1666 = vmatpush1.xpose.msra.mxu0 0.0
        %1667 = vmatprep.subr.mxu0 0.0
        %1668 = vmatpush1.xpose.msra.mxu0 0.0
        %1669 = vmatprep.subr.mxu0 0.0
        %1670 = vmatpush1.xpose.msra.mxu0 0.0
        %1671 = vmatprep.subr.mxu0 0.0
        %1672 = vmatpush1.xpose.msra.mxu0 0.0
        %1673 = vmatprep.subr.mxu0 0.0
        %1674 = vmatpush1.xpose.msra.mxu0 %v1640
        %1675 = vmatprep.subr.mxu0 0.0
        %1676 = vmatpush2.xpose.msra.mxu0 0.0
        %1677 = vmatprep.subr.mxu0 0.0
        %1678 = vmatpush2.xpose.msra.mxu0 0.0
        %1679 = vmatprep.subr.mxu0 0.0
        %1680 = vmatpush2.xpose.msra.mxu0 0.0
        %1681 = vmatprep.subr.mxu0 0.0
        %1682 = vmatpush2.xpose.msra.mxu0 0.0
        %1683 = vmatprep.subr.mxu0 0.0
        %1684 = vmatpush2.xpose.msra.mxu0 0.0
        %1685 = vmatprep.subr.mxu0 0.0
        %1686 = vmatpush2.xpose.msra.mxu0 0.0
        %1687 = vmatprep.subr.mxu0 0.0
        %1688 = vmatpush2.xpose.msra.mxu0 0.0
        %1689 = vmatprep.subr.mxu0 0.0
        %1690 = vmatpush2.xpose.msra.mxu0 0.0
        %1691 = vmatprep.subr.mxu0 0.0
        %1692 = vmatpush2.xpose.msra.mxu0 0.0
        %1693 = vmatprep.subr.mxu0 0.0
        %1694 = vmatpush2.xpose.msra.mxu0 0.0
        %1695 = vmatprep.subr.mxu0 0.0
        %1696 = vmatpush2.xpose.msra.mxu0 0.0
        %1697 = vmatprep.subr.mxu0 0.0
        %1698 = vmatpush2.xpose.msra.mxu0 0.0
        %1699 = vmatprep.subr.mxu0 0.0
        %1700 = vmatpush2.xpose.msra.mxu0 0.0
        %1701 = vmatprep.subr.mxu0 0.0
        %1702 = vmatpush2.xpose.msra.mxu0 0.0
        %1703 = vmatprep.subr.mxu0 0.0
        %1704 = vmatpush2.xpose.msra.mxu0 0.0
        %1705 = vmatprep.subr.mxu0 0.0
        %1706 = vmatpush2.xpose.msra.mxu0 0.0
        %1707 = vmatprep.mubr.f32.mxu0 0.0
        %1708 = vmatmul.mubr.f32.gmra.mxu0 %v1641
        %v1709 = vpop.f32.mrf.mxu0
        %v1710 = vadd.f32 0.0, %v1709
        %v1711 = vpop.f32.mrf.mxu0
        %1712 = vmatprep.mubr.f32.mxu0 0.0
        %1713 = vmatmul.mubr.f32.gmra.mxu0 %v1642
        %v1714 = vpop.f32.mrf.mxu0
        %v1715 = vadd.f32 0.0, %v1714
        %v1716 = vpop.f32.mrf.mxu0
        %1717 = vdwg.mxu0
        %v1718 = vmul.f32 %v1710, 0.17677669
        %v1719 = vmul.f32 %v1715, 0.17677669
        %vm1720 = vcmp.gt.f32.partialorder %v1361, 0.0
        %vm1721 = vcmp.gt.f32.partialorder %v1364, 0.0
        %v1722 = vsel %vm1720, 1, 0
        %v1723 = vsel %vm1721, 1, 0
        %vm1724 = vcmp.eq.s32.totalorder %v1722, 1
        %vm1725 = vcmp.eq.s32.totalorder %v1723, 1
        %v1726 = vsel %vm1724, %v1718, -1e+30
        %v1727 = vsel %vm1725, %v1719, -1e+30
        %v1728 = vsel %vm1261, %v1726, -inf
        %v1729 = vrot.slane %v1728, 4
        %v1730 = vmax.f32 %v1728, %v1729
        %v1731 = vrot.slane %v1730, 2
        %v1732 = vmax.f32 %v1730, %v1731
        %v1733 = vrot.slane %v1732, 1
        %v1734 = vmax.f32 %v1732, %v1733
        %v1735 = vsel %vm1261, %v1727, -inf
        %v1736 = vrot.slane %v1735, 4
        %v1737 = vmax.f32 %v1735, %v1736
        %v1738 = vrot.slane %v1737, 2
        %v1739 = vmax.f32 %v1737, %v1738
        %v1740 = vrot.slane %v1739, 1
        %v1741 = vmax.f32 %v1739, %v1740
        %v1742 = vsub.f32 %v1726, %v1734
        %v1743 = vsub.f32 %v1727, %v1741
        %v1744 = vmul.f32 %v1742, 1.442695
        %v1745 = vpow.pop %v1744
        %v1746 = vmul.f32 %v1743, 1.442695
        %v1747 = vpow.pop %v1746
        %v1748 = vmul.f32 %v1745, %v1361
        %v1749 = vmul.f32 %v1747, %v1364
        %v1750 = vsel %vm1261, %v1748, 0.0
        %v1751 = vrot.slane %v1750, 4
        %v1752 = vadd.f32 %v1750, %v1751
        %v1753 = vrot.slane %v1752, 2
        %v1754 = vadd.f32 %v1752, %v1753
        %v1755 = vrot.slane %v1754, 1
        %v1756 = vadd.f32 %v1754, %v1755
        %v1757 = vsel %vm1261, %v1749, 0.0
        %v1758 = vrot.slane %v1757, 4
        %v1759 = vadd.f32 %v1757, %v1758
        %v1760 = vrot.slane %v1759, 2
        %v1761 = vadd.f32 %v1759, %v1760
        %v1762 = vrot.slane %v1761, 1
        %v1763 = vadd.f32 %v1761, %v1762
        %v1764 = vrcp.pop %v1756
        %v1765 = vrcp.pop %v1763
        %v1766 = vmul.f32 %v1748, %v1764
        %v1767 = vmul.f32 %v1749, %v1765
        %v1769 = vsel %vm1261, %v1766, 0
        %v1772 = vsel %vm1261, %v1767, 0
        %1774 = vmatprep.subr.mxu0 0.0
        %1775 = vmatpush1.msra.mxu0 0.0
        %1776 = vmatprep.subr.mxu0 0.0
        %1777 = vmatpush1.msra.mxu0 0.0
        %1778 = vmatprep.subr.mxu0 0.0
        %1779 = vmatpush1.msra.mxu0 0.0
        %1780 = vmatprep.subr.mxu0 0.0
        %1781 = vmatpush1.msra.mxu0 0.0
        %1782 = vmatprep.subr.mxu0 0.0
        %1783 = vmatpush1.msra.mxu0 0.0
        %1784 = vmatprep.subr.mxu0 0.0
        %1785 = vmatpush1.msra.mxu0 0.0
        %1786 = vmatprep.subr.mxu0 0.0
        %1787 = vmatpush1.msra.mxu0 0.0
        %1788 = vmatprep.subr.mxu0 0.0
        %1789 = vmatpush1.msra.mxu0 0.0
        %1790 = vmatprep.subr.mxu0 0.0
        %1791 = vmatpush1.msra.mxu0 0.0
        %1792 = vmatprep.subr.mxu0 0.0
        %1793 = vmatpush1.msra.mxu0 0.0
        %1794 = vmatprep.subr.mxu0 0.0
        %1795 = vmatpush1.msra.mxu0 0.0
        %1796 = vmatprep.subr.mxu0 0.0
        %1797 = vmatpush1.msra.mxu0 0.0
        %1798 = vmatprep.subr.mxu0 0.0
        %1799 = vmatpush1.msra.mxu0 0.0
        %1800 = vmatprep.subr.mxu0 0.0
        %1801 = vmatpush1.msra.mxu0 0.0
        %1802 = vmatprep.subr.mxu0 0.0
        %1803 = vmatpush1.msra.mxu0 0.0
        %1804 = vmatprep.subr.mxu0 0.0
        %1805 = vmatpush1.msra.mxu0 %v1640
        %1806 = vmatprep.subr.mxu0 0.0
        %1807 = vmatpush2.msra.mxu0 0.0
        %1808 = vmatprep.subr.mxu0 0.0
        %1809 = vmatpush2.msra.mxu0 0.0
        %1810 = vmatprep.subr.mxu0 0.0
        %1811 = vmatpush2.msra.mxu0 0.0
        %1812 = vmatprep.subr.mxu0 0.0
        %1813 = vmatpush2.msra.mxu0 0.0
        %1814 = vmatprep.subr.mxu0 0.0
        %1815 = vmatpush2.msra.mxu0 0.0
        %1816 = vmatprep.subr.mxu0 0.0
        %1817 = vmatpush2.msra.mxu0 0.0
        %1818 = vmatprep.subr.mxu0 0.0
        %1819 = vmatpush2.msra.mxu0 0.0
        %1820 = vmatprep.subr.mxu0 0.0
        %1821 = vmatpush2.msra.mxu0 0.0
        %1822 = vmatprep.subr.mxu0 0.0
        %1823 = vmatpush2.msra.mxu0 0.0
        %1824 = vmatprep.subr.mxu0 0.0
        %1825 = vmatpush2.msra.mxu0 0.0
        %1826 = vmatprep.subr.mxu0 0.0
        %1827 = vmatpush2.msra.mxu0 0.0
        %1828 = vmatprep.subr.mxu0 0.0
        %1829 = vmatpush2.msra.mxu0 0.0
        %1830 = vmatprep.subr.mxu0 0.0
        %1831 = vmatpush2.msra.mxu0 0.0
        %1832 = vmatprep.subr.mxu0 0.0
        %1833 = vmatpush2.msra.mxu0 0.0
        %1834 = vmatprep.subr.mxu0 0.0
        %1835 = vmatpush2.msra.mxu0 0.0
        %1836 = vmatprep.subr.mxu0 0.0
        %1837 = vmatpush2.msra.mxu0 0.0
        %1838 = vmatprep.mubr.f32.mxu0 0.0
        %1839 = vmatmul.mubr.f32.gmra.mxu0 %v1769
        %v1840 = vpop.f32.mrf.mxu0
        %v1841 = vadd.f32 0.0, %v1840
        %v1842 = vpop.f32.mrf.mxu0
        %1843 = vmatprep.mubr.f32.mxu0 0.0
        %1844 = vmatmul.mubr.f32.gmra.mxu0 %v1772
        %v1845 = vpop.f32.mrf.mxu0
        %v1846 = vadd.f32 0.0, %v1845
        %v1847 = vpop.f32.mrf.mxu0
        %1848 = vdwg.mxu0
        %v1849 = vmul.f32 %v1841, %v1634
        %v1850 = vmul.f32 %v1846, %v1637
        %v1851 = vld [vmem:[#allocation10] sm:$0xff]
        %vm1852 = vcmask 130048
        %v1854 = vsel %vm1852, %v1851, 0
        %1856 = vmatprep.subr.mxu0 0.0
        %1857 = vmatpush1.msra.mxu0 0.0
        %1858 = vmatprep.subr.mxu0 0.0
        %1859 = vmatpush1.msra.mxu0 0.0
        %1860 = vmatprep.subr.mxu0 0.0
        %1861 = vmatpush1.msra.mxu0 0.0
        %1862 = vmatprep.subr.mxu0 0.0
        %1863 = vmatpush1.msra.mxu0 0.0
        %1864 = vmatprep.subr.mxu0 0.0
        %1865 = vmatpush1.msra.mxu0 0.0
        %1866 = vmatprep.subr.mxu0 0.0
        %1867 = vmatpush1.msra.mxu0 0.0
        %1868 = vmatprep.subr.mxu0 0.0
        %1869 = vmatpush1.msra.mxu0 0.0
        %1870 = vmatprep.subr.mxu0 0.0
        %1871 = vmatpush1.msra.mxu0 0.0
        %1872 = vmatprep.subr.mxu0 0.0
        %1873 = vmatpush1.msra.mxu0 0.0
        %1874 = vmatprep.subr.mxu0 0.0
        %1875 = vmatpush1.msra.mxu0 0.0
        %1876 = vmatprep.subr.mxu0 0.0
        %1877 = vmatpush1.msra.mxu0 0.0
        %1878 = vmatprep.subr.mxu0 0.0
        %1879 = vmatpush1.msra.mxu0 0.0
        %1880 = vmatprep.subr.mxu0 0.0
        %1881 = vmatpush1.msra.mxu0 0.0
        %1882 = vmatprep.subr.mxu0 0.0
        %1883 = vmatpush1.msra.mxu0 0.0
        %1884 = vmatprep.subr.mxu0 0.0
        %1885 = vmatpush1.msra.mxu0 %v1850
        %1886 = vmatprep.subr.mxu0 0.0
        %1887 = vmatpush1.msra.mxu0 %v1849
        %1888 = vmatprep.subr.mxu0 0.0
        %1889 = vmatpush2.msra.mxu0 0.0
        %1890 = vmatprep.subr.mxu0 0.0
        %1891 = vmatpush2.msra.mxu0 0.0
        %1892 = vmatprep.subr.mxu0 0.0
        %1893 = vmatpush2.msra.mxu0 0.0
        %1894 = vmatprep.subr.mxu0 0.0
        %1895 = vmatpush2.msra.mxu0 0.0
        %1896 = vmatprep.subr.mxu0 0.0
        %1897 = vmatpush2.msra.mxu0 0.0
        %1898 = vmatprep.subr.mxu0 0.0
        %1899 = vmatpush2.msra.mxu0 0.0
        %1900 = vmatprep.subr.mxu0 0.0
        %1901 = vmatpush2.msra.mxu0 0.0
        %1902 = vmatprep.subr.mxu0 0.0
        %1903 = vmatpush2.msra.mxu0 0.0
        %1904 = vmatprep.subr.mxu0 0.0
        %1905 = vmatpush2.msra.mxu0 0.0
        %1906 = vmatprep.subr.mxu0 0.0
        %1907 = vmatpush2.msra.mxu0 0.0
        %1908 = vmatprep.subr.mxu0 0.0
        %1909 = vmatpush2.msra.mxu0 0.0
        %1910 = vmatprep.subr.mxu0 0.0
        %1911 = vmatpush2.msra.mxu0 0.0
        %1912 = vmatprep.subr.mxu0 0.0
        %1913 = vmatpush2.msra.mxu0 0.0
        %1914 = vmatprep.subr.mxu0 0.0
        %1915 = vmatpush2.msra.mxu0 0.0
        %1916 = vmatprep.subr.mxu0 0.0
        %1917 = vmatpush2.msra.mxu0 0.0
        %1918 = vmatprep.subr.mxu0 0.0
        %1919 = vmatpush2.msra.mxu0 0.0
        %1920 = vmatprep.mubr.f32.mxu0 0.0
        %1921 = vmatmul.mubr.f32.gmra.mxu0 %v1854
        %v1922 = vpop.f32.mrf.mxu0
        %v1923 = vadd.f32 0.0, %v1922
        %v1924 = vpop.f32.mrf.mxu0
        %1925 = vdwg.mxu0
        %v1926 = vpack.c.bf16 %v1923, %v1923
        %v1927 = vld [vmem:[%s11] sm:$0xf]
        %v1928 = vld [vmem:[%s11 + $0x4] sm:$0xf]
        %v1929 = vld [vmem:[%s11 + $0x8] sm:$0xf]
        %v1930 = vld [vmem:[%s11 + $0xc] sm:$0xf]
        %v1931 = vld [vmem:[%s11 + $0x10] sm:$0xf]
        %v1932 = vld [vmem:[%s11 + $0x14] sm:$0xf]
        %v1933 = vld [vmem:[%s11 + $0x18] sm:$0xf]
        %v1934 = vld [vmem:[%s11 + $0x1c] sm:$0xf]
        %v1935 = vld [vmem:[%s11 + $0x20] sm:$0xf]
        %v1936 = vld [vmem:[%s11 + $0x24] sm:$0xf]
        %v1937 = vld [vmem:[%s11 + $0x28] sm:$0xf]
        %v1938 = vld [vmem:[%s11 + $0x2c] sm:$0xf]
        %v1939 = vld [vmem:[%s11 + $0x30] sm:$0xf]
        %v1940 = vld [vmem:[%s11 + $0x34] sm:$0xf]
        %v1941 = vld [vmem:[%s11 + $0x38] sm:$0xf]
        %v1942 = vld [vmem:[%s11 + $0x3c] sm:$0xf]
        %v1943 = vld [vmem:[%s12] sm:$0x1]
        %v1945 = vlaneseq
        %v1946 = vshrl.u32 %v1945, 7
        %v1947 = vsub.s32 0, %v1946
        %v1948 = vrot.slane %v1943, %v1947
        %v1966 = vunpack.c.l.b16 %v1927
        %v1967 = vunpack.c.l.b16 %v1928
        %v1968 = vunpack.c.l.b16 %v1929
        %v1969 = vunpack.c.l.b16 %v1930
        %v1970 = vunpack.c.l.b16 %v1931
        %v1971 = vunpack.c.l.b16 %v1932
        %v1972 = vunpack.c.l.b16 %v1933
        %v1973 = vunpack.c.l.b16 %v1934
        %v1974 = vunpack.c.l.b16 %v1935
        %v1975 = vunpack.c.l.b16 %v1936
        %v1976 = vunpack.c.l.b16 %v1937
        %v1977 = vunpack.c.l.b16 %v1938
        %v1978 = vunpack.c.l.b16 %v1939
        %v1979 = vunpack.c.l.b16 %v1940
        %v1980 = vunpack.c.l.b16 %v1941
        %v1981 = vunpack.c.l.b16 %v1942
        %v1982 = vpack.c.b16 %v1967, %v1966
        %v1983 = vpack.c.b16 %v1969, %v1968
        %v1984 = vpack.c.b16 %v1971, %v1970
        %v1985 = vpack.c.b16 %v1973, %v1972
        %v1986 = vpack.c.b16 %v1975, %v1974
        %v1987 = vpack.c.b16 %v1977, %v1976
        %v1988 = vpack.c.b16 %v1979, %v1978
        %v1989 = vpack.c.b16 %v1981, %v1980
        %1998 = vmatprep.subr.bf16.mxu0 0
        %1999 = vmatpush1.bf16.msra.mxu0 %v1989
        %2000 = vmatprep.subr.bf16.mxu0 0
        %2001 = vmatpush1.bf16.msra.mxu0 %v1988
        %2002 = vmatprep.subr.bf16.mxu0 0
        %2003 = vmatpush1.bf16.msra.mxu0 %v1987
        %2004 = vmatprep.subr.bf16.mxu0 0
        %2005 = vmatpush1.bf16.msra.mxu0 %v1986
        %2006 = vmatprep.subr.bf16.mxu0 0
        %2007 = vmatpush1.bf16.msra.mxu0 %v1985
        %2008 = vmatprep.subr.bf16.mxu0 0
        %2009 = vmatpush1.bf16.msra.mxu0 %v1984
        %2010 = vmatprep.subr.bf16.mxu0 0
        %2011 = vmatpush1.bf16.msra.mxu0 %v1983
        %2012 = vmatprep.subr.bf16.mxu0 0
        %2013 = vmatpush1.bf16.msra.mxu0 %v1982
        %2014 = vmatprep.subr.bf16.mxu0 0
        %2015 = vmatpush2.bf16.msra.mxu0 0
        %2016 = vmatprep.subr.bf16.mxu0 0
        %2017 = vmatpush2.bf16.msra.mxu0 0
        %2018 = vmatprep.subr.bf16.mxu0 0
        %2019 = vmatpush2.bf16.msra.mxu0 0
        %2020 = vmatprep.subr.bf16.mxu0 0
        %2021 = vmatpush2.bf16.msra.mxu0 0
        %2022 = vmatprep.subr.bf16.mxu0 0
        %2023 = vmatpush2.bf16.msra.mxu0 0
        %2024 = vmatprep.subr.bf16.mxu0 0
        %2025 = vmatpush2.bf16.msra.mxu0 0
        %2026 = vmatprep.subr.bf16.mxu0 0
        %2027 = vmatpush2.bf16.msra.mxu0 0
        %2028 = vmatprep.subr.bf16.mxu0 0
        %2029 = vmatpush2.bf16.msra.mxu0 0
        %2030 = vmatprep.mubr.bf16.mxu0 0
        %2031 = vmatmul.mubr.bf16.gmra.mxu0 %v1926
        %v2032 = vpop.f32.mrf.mxu0
        %v2033 = vadd.f32 %v1948, %v2032
        %v2034 = vpop.f32.mrf.mxu0
        %v2035 = vpop.f32.mrf.mxu0
        %v2036 = vpop.f32.mrf.mxu0
        %2037 = vdwg.mxu0
        %2038 = vst [vmem:[%s684] sm:$0xff] %v2033
        %v2039 = vld [vmem:[%s13] sm:$0xff]
        %v2040 = vld [vmem:[%s13 + $0x8] sm:$0xff]
        %v2041 = vld [vmem:[%s13 + $0x10] sm:$0xff]
        %v2042 = vld [vmem:[%s13 + $0x18] sm:$0xff]
        %v2043 = vld [vmem:[%s13 + $0x20] sm:$0xff]
        %v2044 = vld [vmem:[%s13 + $0x28] sm:$0xff]
        %v2045 = vld [vmem:[%s13 + $0x30] sm:$0xff]
        %v2046 = vld [vmem:[%s13 + $0x38] sm:$0xff]
        %v2047 = vld [vmem:[%s13 + $0x40] sm:$0xff]
        %v2048 = vld [vmem:[%s13 + $0x48] sm:$0xff]
        %v2049 = vld [vmem:[%s13 + $0x50] sm:$0xff]
        %v2050 = vld [vmem:[%s13 + $0x58] sm:$0xff]
        %v2051 = vld [vmem:[%s13 + $0x60] sm:$0xff]
        %v2052 = vld [vmem:[%s13 + $0x68] sm:$0xff]
        %v2053 = vld [vmem:[%s13 + $0x70] sm:$0xff]
        %v2054 = vld [vmem:[%s13 + $0x78] sm:$0xff]
        %v2055 = vld [vmem:[%s14] sm:$0x3]
        %v2057 = vlaneseq
        %v2058 = vshrl.u32 %v2057, 7
        %v2059 = vsub.s32 0, %v2058
        %v2060 = vrot.slane %v2055, %v2059
        %v2061 = vlaneseq
        %v2062 = vshrl.u32 %v2061, 7
        %v2063 = vsub.s32 1, %v2062
        %v2064 = vrot.slane %v2055, %v2063
        %v2083 = vunpack.c.l.b16 %v2039
        %v2084 = vunpack.c.h.b16 %v2039
        %v2085 = vunpack.c.l.b16 %v2040
        %v2086 = vunpack.c.h.b16 %v2040
        %v2087 = vunpack.c.l.b16 %v2041
        %v2088 = vunpack.c.h.b16 %v2041
        %v2089 = vunpack.c.l.b16 %v2042
        %v2090 = vunpack.c.h.b16 %v2042
        %v2091 = vunpack.c.l.b16 %v2043
        %v2092 = vunpack.c.h.b16 %v2043
        %v2093 = vunpack.c.l.b16 %v2044
        %v2094 = vunpack.c.h.b16 %v2044
        %v2095 = vunpack.c.l.b16 %v2045
        %v2096 = vunpack.c.h.b16 %v2045
        %v2097 = vunpack.c.l.b16 %v2046
        %v2098 = vunpack.c.h.b16 %v2046
        %v2099 = vunpack.c.l.b16 %v2047
        %v2100 = vunpack.c.h.b16 %v2047
        %v2101 = vunpack.c.l.b16 %v2048
        %v2102 = vunpack.c.h.b16 %v2048
        %v2103 = vunpack.c.l.b16 %v2049
        %v2104 = vunpack.c.h.b16 %v2049
        %v2105 = vunpack.c.l.b16 %v2050
        %v2106 = vunpack.c.h.b16 %v2050
        %v2107 = vunpack.c.l.b16 %v2051
        %v2108 = vunpack.c.h.b16 %v2051
        %v2109 = vunpack.c.l.b16 %v2052
        %v2110 = vunpack.c.h.b16 %v2052
        %v2111 = vunpack.c.l.b16 %v2053
        %v2112 = vunpack.c.h.b16 %v2053
        %v2113 = vunpack.c.l.b16 %v2054
        %v2114 = vunpack.c.h.b16 %v2054
        %v2115 = vpack.c.b16 %v2085, %v2083
        %v2116 = vpack.c.b16 %v2086, %v2084
        %v2117 = vpack.c.b16 %v2089, %v2087
        %v2118 = vpack.c.b16 %v2090, %v2088
        %v2119 = vpack.c.b16 %v2093, %v2091
        %v2120 = vpack.c.b16 %v2094, %v2092
        %v2121 = vpack.c.b16 %v2097, %v2095
        %v2122 = vpack.c.b16 %v2098, %v2096
        %v2123 = vpack.c.b16 %v2101, %v2099
        %v2124 = vpack.c.b16 %v2102, %v2100
        %v2125 = vpack.c.b16 %v2105, %v2103
        %v2126 = vpack.c.b16 %v2106, %v2104
        %v2127 = vpack.c.b16 %v2109, %v2107
        %v2128 = vpack.c.b16 %v2110, %v2108
        %v2129 = vpack.c.b16 %v2113, %v2111
        %v2130 = vpack.c.b16 %v2114, %v2112
        %2147 = vmatprep.subr.bf16.mxu0 %v2130
        %2148 = vmatpush1.bf16.msra.mxu0 %v2129
        %2149 = vmatprep.subr.bf16.mxu0 %v2128
        %2150 = vmatpush1.bf16.msra.mxu0 %v2127
        %2151 = vmatprep.subr.bf16.mxu0 %v2126
        %2152 = vmatpush1.bf16.msra.mxu0 %v2125
        %2153 = vmatprep.subr.bf16.mxu0 %v2124
        %2154 = vmatpush1.bf16.msra.mxu0 %v2123
        %2155 = vmatprep.subr.bf16.mxu0 %v2122
        %2156 = vmatpush1.bf16.msra.mxu0 %v2121
        %2157 = vmatprep.subr.bf16.mxu0 %v2120
        %2158 = vmatpush1.bf16.msra.mxu0 %v2119
        %2159 = vmatprep.subr.bf16.mxu0 %v2118
        %2160 = vmatpush1.bf16.msra.mxu0 %v2117
        %2161 = vmatprep.subr.bf16.mxu0 %v2116
        %2162 = vmatpush1.bf16.msra.mxu0 %v2115
        %2163 = vmatprep.subr.bf16.mxu0 0
        %2164 = vmatpush2.bf16.msra.mxu0 0
        %2165 = vmatprep.subr.bf16.mxu0 0
        %2166 = vmatpush2.bf16.msra.mxu0 0
        %2167 = vmatprep.subr.bf16.mxu0 0
        %2168 = vmatpush2.bf16.msra.mxu0 0
        %2169 = vmatprep.subr.bf16.mxu0 0
        %2170 = vmatpush2.bf16.msra.mxu0 0
        %2171 = vmatprep.subr.bf16.mxu0 0
        %2172 = vmatpush2.bf16.msra.mxu0 0
        %2173 = vmatprep.subr.bf16.mxu0 0
        %2174 = vmatpush2.bf16.msra.mxu0 0
        %2175 = vmatprep.subr.bf16.mxu0 0
        %2176 = vmatpush2.bf16.msra.mxu0 0
        %2177 = vmatprep.subr.bf16.mxu0 0
        %2178 = vmatpush2.bf16.msra.mxu0 0
        %2179 = vmatprep.mubr.bf16.mxu0 0
        %2180 = vmatmul.mubr.bf16.gmra.mxu0 %v1366
        %v2181 = vpop.f32.mrf.mxu0
        %v2182 = vadd.f32 %v2060, %v2181
        %v2183 = vpop.f32.mrf.mxu0
        %v2184 = vadd.f32 %v2064, %v2183
        %v2185 = vpop.f32.mrf.mxu0
        %v2186 = vadd.f32 %v2060, %v2185
        %v2187 = vpop.f32.mrf.mxu0
        %v2188 = vadd.f32 %v2064, %v2187
        %2189 = vdwg.mxu0
        %v2190 = vmax.f32 %v2182, 0.0
        %v2191 = vmax.f32 %v2184, 0.0
        %v2192 = vmax.f32 %v2186, 0.0
        %v2193 = vmax.f32 %v2188, 0.0
        %v2194 = vpack.c.bf16 %v2192, %v2190
        %v2195 = vpack.c.bf16 %v2193, %v2191
        %v2196 = vld [vmem:[%s15] sm:$0xf]
        %v2197 = vld [vmem:[%s15 + $0x4] sm:$0xf]
        %v2198 = vld [vmem:[%s15 + $0x8] sm:$0xf]
        %v2199 = vld [vmem:[%s15 + $0xc] sm:$0xf]
        %v2200 = vld [vmem:[%s15 + $0x10] sm:$0xf]
        %v2201 = vld [vmem:[%s15 + $0x14] sm:$0xf]
        %v2202 = vld [vmem:[%s15 + $0x18] sm:$0xf]
        %v2203 = vld [vmem:[%s15 + $0x1c] sm:$0xf]
        %v2204 = vld [vmem:[%s15 + $0x20] sm:$0xf]
        %v2205 = vld [vmem:[%s15 + $0x24] sm:$0xf]
        %v2206 = vld [vmem:[%s15 + $0x28] sm:$0xf]
        %v2207 = vld [vmem:[%s15 + $0x2c] sm:$0xf]
        %v2208 = vld [vmem:[%s15 + $0x30] sm:$0xf]
        %v2209 = vld [vmem:[%s15 + $0x34] sm:$0xf]
        %v2210 = vld [vmem:[%s15 + $0x38] sm:$0xf]
        %v2211 = vld [vmem:[%s15 + $0x3c] sm:$0xf]
        %v2212 = vld [vmem:[%s15 + $0x40] sm:$0xf]
        %v2213 = vld [vmem:[%s15 + $0x44] sm:$0xf]
        %v2214 = vld [vmem:[%s15 + $0x48] sm:$0xf]
        %v2215 = vld [vmem:[%s15 + $0x4c] sm:$0xf]
        %v2216 = vld [vmem:[%s15 + $0x50] sm:$0xf]
        %v2217 = vld [vmem:[%s15 + $0x54] sm:$0xf]
        %v2218 = vld [vmem:[%s15 + $0x58] sm:$0xf]
        %v2219 = vld [vmem:[%s15 + $0x5c] sm:$0xf]
        %v2220 = vld [vmem:[%s15 + $0x60] sm:$0xf]
        %v2221 = vld [vmem:[%s15 + $0x64] sm:$0xf]
        %v2222 = vld [vmem:[%s15 + $0x68] sm:$0xf]
        %v2223 = vld [vmem:[%s15 + $0x6c] sm:$0xf]
        %v2224 = vld [vmem:[%s15 + $0x70] sm:$0xf]
        %v2225 = vld [vmem:[%s15 + $0x74] sm:$0xf]
        %v2226 = vld [vmem:[%s15 + $0x78] sm:$0xf]
        %v2227 = vld [vmem:[%s15 + $0x7c] sm:$0xf]
        %v2228 = vld [vmem:[%s16] sm:$0x1]
        %v2230 = vlaneseq
        %v2231 = vshrl.u32 %v2230, 7
        %v2232 = vsub.s32 0, %v2231
        %v2233 = vrot.slane %v2228, %v2232
        %v2267 = vunpack.c.l.b16 %v2196
        %v2268 = vunpack.c.l.b16 %v2197
        %v2269 = vunpack.c.l.b16 %v2198
        %v2270 = vunpack.c.l.b16 %v2199
        %v2271 = vunpack.c.l.b16 %v2200
        %v2272 = vunpack.c.l.b16 %v2201
        %v2273 = vunpack.c.l.b16 %v2202
        %v2274 = vunpack.c.l.b16 %v2203
        %v2275 = vunpack.c.l.b16 %v2204
        %v2276 = vunpack.c.l.b16 %v2205
        %v2277 = vunpack.c.l.b16 %v2206
        %v2278 = vunpack.c.l.b16 %v2207
        %v2279 = vunpack.c.l.b16 %v2208
        %v2280 = vunpack.c.l.b16 %v2209
        %v2281 = vunpack.c.l.b16 %v2210
        %v2282 = vunpack.c.l.b16 %v2211
        %v2283 = vunpack.c.l.b16 %v2212
        %v2284 = vunpack.c.l.b16 %v2213
        %v2285 = vunpack.c.l.b16 %v2214
        %v2286 = vunpack.c.l.b16 %v2215
        %v2287 = vunpack.c.l.b16 %v2216
        %v2288 = vunpack.c.l.b16 %v2217
        %v2289 = vunpack.c.l.b16 %v2218
        %v2290 = vunpack.c.l.b16 %v2219
        %v2291 = vunpack.c.l.b16 %v2220
        %v2292 = vunpack.c.l.b16 %v2221
        %v2293 = vunpack.c.l.b16 %v2222
        %v2294 = vunpack.c.l.b16 %v2223
        %v2295 = vunpack.c.l.b16 %v2224
        %v2296 = vunpack.c.l.b16 %v2225
        %v2297 = vunpack.c.l.b16 %v2226
        %v2298 = vunpack.c.l.b16 %v2227
        %v2299 = vpack.c.b16 %v2268, %v2267
        %v2300 = vpack.c.b16 %v2270, %v2269
        %v2301 = vpack.c.b16 %v2272, %v2271
        %v2302 = vpack.c.b16 %v2274, %v2273
        %v2303 = vpack.c.b16 %v2276, %v2275
        %v2304 = vpack.c.b16 %v2278, %v2277
        %v2305 = vpack.c.b16 %v2280, %v2279
        %v2306 = vpack.c.b16 %v2282, %v2281
        %v2307 = vpack.c.b16 %v2284, %v2283
        %v2308 = vpack.c.b16 %v2286, %v2285
        %v2309 = vpack.c.b16 %v2288, %v2287
        %v2310 = vpack.c.b16 %v2290, %v2289
        %v2311 = vpack.c.b16 %v2292, %v2291
        %v2312 = vpack.c.b16 %v2294, %v2293
        %v2313 = vpack.c.b16 %v2296, %v2295
        %v2314 = vpack.c.b16 %v2298, %v2297
        %2331 = vmatprep.subr.bf16.mxu0 0
        %2332 = vmatpush1.bf16.msra.mxu0 %v2306
        %2333 = vmatprep.subr.bf16.mxu0 0
        %2334 = vmatpush1.bf16.msra.mxu0 %v2305
        %2335 = vmatprep.subr.bf16.mxu0 0
        %2336 = vmatpush1.bf16.msra.mxu0 %v2304
        %2337 = vmatprep.subr.bf16.mxu0 0
        %2338 = vmatpush1.bf16.msra.mxu0 %v2303
        %2339 = vmatprep.subr.bf16.mxu0 0
        %2340 = vmatpush1.bf16.msra.mxu0 %v2302
        %2341 = vmatprep.subr.bf16.mxu0 0
        %2342 = vmatpush1.bf16.msra.mxu0 %v2301
        %2343 = vmatprep.subr.bf16.mxu0 0
        %2344 = vmatpush1.bf16.msra.mxu0 %v2300
        %2345 = vmatprep.subr.bf16.mxu0 0
        %2346 = vmatpush1.bf16.msra.mxu0 %v2299
        %2347 = vmatprep.subr.bf16.mxu0 0
        %2348 = vmatpush2.bf16.msra.mxu0 %v2314
        %2349 = vmatprep.subr.bf16.mxu0 0
        %2350 = vmatpush2.bf16.msra.mxu0 %v2313
        %2351 = vmatprep.subr.bf16.mxu0 0
        %2352 = vmatpush2.bf16.msra.mxu0 %v2312
        %2353 = vmatprep.subr.bf16.mxu0 0
        %2354 = vmatpush2.bf16.msra.mxu0 %v2311
        %2355 = vmatprep.subr.bf16.mxu0 0
        %2356 = vmatpush2.bf16.msra.mxu0 %v2310
        %2357 = vmatprep.subr.bf16.mxu0 0
        %2358 = vmatpush2.bf16.msra.mxu0 %v2309
        %2359 = vmatprep.subr.bf16.mxu0 0
        %2360 = vmatpush2.bf16.msra.mxu0 %v2308
        %2361 = vmatprep.subr.bf16.mxu0 0
        %2362 = vmatpush2.bf16.msra.mxu0 %v2307
        %2363 = vmatprep.mubr.bf16.mxu0 %v2195
        %2364 = vmatmul.mubr.bf16.gmra.mxu0 %v2194
        %v2365 = vpop.f32.mrf.mxu0
        %v2366 = vadd.f32 %v2233, %v2365
        %v2367 = vpop.f32.mrf.mxu0
        %v2368 = vpop.f32.mrf.mxu0
        %v2369 = vadd.f32 %v2233, %v2368
        %v2370 = vpop.f32.mrf.mxu0
        %2371 = vdwg.mxu0
        %2372 = vst [vmem:[%s691] sm:$0xff] %v2366
        %2373 = vst [vmem:[%s691 + $0x8] sm:$0xff] %v2369
        %s2374 = sand.u32 %s422, 1
        %s2375 = scalar_lea.sflag [#allocation4], %s2374
        %s2376 = sand.u32 %s422, 1
        %s2377 = smul.addr %s2376, 8
        %s2378 = scalar_lea.vmem [#allocation13], %s2377
        %s2379 = sand.u32 %s448, 1
        %s2380 = scalar_lea.sflag [#allocation15], %s2379
        %s2381 = sand.u32 %s448, 1
        %s2382 = smul.addr %s2381, 16
        %s2383 = scalar_lea.vmem [#allocation14], %s2382
        // Predicated region
        $region113: #{tpu_custom_call.1} parent=87 // pred_check
          %p2384 = pneg %p432
        $region114: #{tpu_custom_call.1} parent=87 // pred_check_branch
          %2386 = sbr.rel (%p2384) target = $region116
        $region115: #{tpu_custom_call.1} parent=87 // pred_region
          %s2388 = ssub.s32 128, 128
          %2389 = vsyncadd %s2375, %s2388
          %s2390 = smul.addr %s42, 128
          %s2391 = scalar_lea.hbm %s17, %s2390
          %s2393 = sshll.u32 %s2378, 4
          %s2394 = int_to_ptr.vmem [resolvable:$true] %s2393
          %2396 = dma.vmem_to_hbm [thread:$0]  %s2394, 128, %s2391, %s2375
        $region116: #{tpu_custom_call.1} parent=87 // pred_fallthru
          _
        // Predicated region
        $region117: #{tpu_custom_call.1} parent=87 // pred_check
          %p2397 = pneg %p458
        $region118: #{tpu_custom_call.1} parent=87 // pred_check_branch
          %2399 = sbr.rel (%p2397) target = $region120
        $region119: #{tpu_custom_call.1} parent=87 // pred_region
          %s2401 = ssub.s32 256, 256
          %2402 = vsyncadd %s2380, %s2401
          %s2403 = smul.addr %s42, 2
          %s2404 = smul.addr %s2403, 128
          %s2405 = scalar_lea.hbm %s18, %s2404
          %s2406 = sshll.u32 %s2383, 4
          %s2407 = int_to_ptr.vmem [resolvable:$true] %s2406
          %2412 = dma.vmem_to_hbm [thread:$0]  %s2407, 256, %s2405, %s2380, 128, 128, 8
        $region120: #{tpu_custom_call.1} parent=87 // pred_fallthru
          _
      $region88: #{tpu_custom_call.1} parent=5 // pred_fallthru
        _
      %p2413 = scmp.le.s32.totalorder 2, %s37
      // Predicated region
      $region121: #{tpu_custom_call.1} parent=5 // pred_check
        %p2414 = pneg %p2413
      $region122: #{tpu_custom_call.1} parent=5 // pred_check_branch
        %2416 = sbr.rel (%p2414) target = $region124
      $region123: #{tpu_custom_call.1} parent=5 // pred_region
        %s2417 = ssub.s32 %s37, 2
        // Predicated region
        $region125: #{tpu_custom_call.1} parent=123 // pred_check
          %p2418 = pneg %p438
        $region126: #{tpu_custom_call.1} parent=123 // pred_check_branch
          %2420 = sbr.rel (%p2418) target = $region128
        $region127: #{tpu_custom_call.1} parent=123 // pred_region
          %s2421 = sand.u32 %s423, 1
          %s2422 = scalar_lea.sflag [#allocation4], %s2421
          %s2423 = sand.u32 %s423, 1
          %s2424 = smul.addr %s2423, 8
          %s2425 = scalar_lea.vmem [#allocation13], %s2424
          %2426 = dma.done %s2422, 128
        $region128: #{tpu_custom_call.1} parent=123 // pred_fallthru
          _
        // Predicated region
        $region129: #{tpu_custom_call.1} parent=123 // pred_check
          %p2427 = pneg %p464
        $region130: #{tpu_custom_call.1} parent=123 // pred_check_branch
          %2429 = sbr.rel (%p2427) target = $region132
        $region131: #{tpu_custom_call.1} parent=123 // pred_region
          %s2430 = sand.u32 %s449, 1
          %s2431 = scalar_lea.sflag [#allocation15], %s2430
          %s2432 = sand.u32 %s449, 1
          %s2433 = smul.addr %s2432, 16
          %s2434 = scalar_lea.vmem [#allocation14], %s2433
          %2435 = dma.done %s2431, 256
        $region132: #{tpu_custom_call.1} parent=123 // pred_fallthru
          _
      $region124: #{tpu_custom_call.1} parent=5 // pred_fallthru
        _
    $region6: #{tpu_custom_call.1} parent=1 // loop_footer
      %s41 = sadd.s32 1, %s37
    $region7: #{tpu_custom_call.1} parent=1 // loop_footer_branch
      %36 = sbr.rel target = $region3
    $region8: #{tpu_custom_call.1} parent=1 // loop_exit
      _
    %2436 = vsyncpa [#allocation3], 1
    %s2437 = scalar_lea.sflag [#allocation3], 1
    %2438 = vsyncpa %s2437, 1
    %2439 = vsyncpa [#allocation6], 1
    %2440 = vsyncpa [#allocation9], 1
    %2441 = vsyncpa [#allocation12], 1
    %2442 = vsyncpa [#allocation4], 1
    %s2443 = scalar_lea.sflag [#allocation4], 1
    %2444 = vsyncpa %s2443, 1
    %2445 = vsyncpa [#allocation15], 1
    %s2446 = scalar_lea.sflag [#allocation15], 1
    %2447 = vsyncpa %s2446, 1

</llo_original>
